<compile_context>
chip_gen: v5e
topology: v5e:2x2
jax: 0.10.0
libtpu: 0.0.40
codegen_flags: <defaults>
</compile_context>

<pallas_src>
import math

import jax
import jax.numpy as jnp
from jax import lax
from jax.experimental import pallas as pl
from jax.experimental.pallas import tpu as pltpu

D_MODEL = 32
NHEAD = 4
DIM_FF = 64
SEQ = 8
BATCH = 2
HEAD_DIM = D_MODEL // NHEAD
ROWS = BATCH * SEQ
EPS = float(jnp.finfo(jnp.float32).eps)  # nn.RMSNorm(eps=None) -> dtype eps


def _rmsnorm(v, w):
    ms = jnp.mean(v * v, axis=-1, keepdims=True)
    return v * lax.rsqrt(ms + EPS) * w


def transformer_block_kernel(
    x_ref, norm_w_ref, wqkv_ref, bqkv_ref, wo_ref, bo_ref, mask_ref,
    ffn_norm_ref, ffn_w1_ref, ffn_b1_ref, ffn_w2_ref, ffn_b2_ref,
    out_ref,
):
    x = x_ref[...]                                   # (B*S, D) = (16, 32)

    # ---- self-attention with pre-RMSNorm (nn.MultiheadAttention semantics) ----
    attn_in = _rmsnorm(x, norm_w_ref[...])

    # fused Q|K|V projection (1/sqrt(HEAD_DIM) already folded into Q cols / Q bias)
    qkv = jnp.dot(attn_in, wqkv_ref[...],
                  preferred_element_type=jnp.float32) + bqkv_ref[...]   # (16, 96)

    # stack heads once -> (H, B*S, HD); attention math is then 2 batched dots total
    def head_stack(base):
        return jnp.stack(
            [qkv[:, base + h * HEAD_DIM: base + (h + 1) * HEAD_DIM]
             for h in range(NHEAD)],
            axis=0)

    qs = head_stack(0)                               # (H, 16, HD)
    ks = head_stack(D_MODEL)                         # (H, 16, HD)
    vs = head_stack(2 * D_MODEL)                     # (H, 16, HD)

    # scores for all heads in one batched dot: (H,16,HD) x (H,16,HD) -> (H,16,16)
    s = lax.dot_general(qs, ks, dimension_numbers=(((2,), (2,)), ((0,), (0,))),
                        preferred_element_type=jnp.float32)
    s = s + mask_ref[...]                            # additive mask blocks cross-batch attn
    s = s - jnp.max(s, axis=-1, keepdims=True)
    p = jnp.exp(s)
    p = p / jnp.sum(p, axis=-1, keepdims=True)       # exact softmax

    # PV for all heads in one batched dot: (H,16,16) x (H,16,HD) -> (H,16,HD)
    o = lax.dot_general(p, vs, dimension_numbers=(((2,), (1,)), ((0,), (0,))),
                        preferred_element_type=jnp.float32)

    # concat heads along lanes, then a single output-projection matmul
    o_cat = jnp.concatenate([o[h] for h in range(NHEAD)], axis=-1)    # (16, 32)
    attn_out = jnp.dot(o_cat, wo_ref[...],
                       preferred_element_type=jnp.float32) + bo_ref[...]

    x1 = x + attn_out                                # first residual

    # ---- FFN: 3 x [RMSNorm -> Linear(D, 2F) -> SwiGLU -> Linear(F, D)] ----
    h = x1
    for i in range(3):                               # static unroll over the 3 sub-blocks
        h = _rmsnorm(h, ffn_norm_ref[i])
        y = jnp.dot(h, ffn_w1_ref[i],
                    preferred_element_type=jnp.float32) + ffn_b1_ref[i]   # (16, 128)
        a = y[:, :DIM_FF]
        g = y[:, DIM_FF:]
        h = a * (g * jax.nn.sigmoid(g))              # SwiGLU: a * silu(gate)
        h = jnp.dot(h, ffn_w2_ref[i],
                    preferred_element_type=jnp.float32) + ffn_b2_ref[i]

    out_ref[...] = x1 + h                            # second residual


def prepare_params(p):
    """One-time packing step (NOT in the per-call forward path)."""
    scale = 1.0 / math.sqrt(HEAD_DIM)
    wqkv = jnp.concatenate([p["wq"] * scale, p["wk"], p["wv"]], axis=1)   # (D, 3D)
    bqkv = jnp.concatenate([p["bq"] * scale, p["bk"], p["bv"]], axis=1)   # (1, 3D)
    row_batch = jnp.arange(ROWS, dtype=jnp.int32) // SEQ
    mask = jnp.where(row_batch[:, None] == row_batch[None, :], 0.0, -1e30)
    mask = mask.astype(jnp.float32)                                       # (16, 16)
    return dict(
        norm_w=p["norm_w"], wqkv=wqkv, bqkv=bqkv, wo=p["wo"], bo=p["bo"],
        attn_mask=mask, ffn_norm=p["ffn_norm"], ffn_w1=p["ffn_w1"],
        ffn_b1=p["ffn_b1"], ffn_w2=p["ffn_w2"], ffn_b2=p["ffn_b2"],
    )


def transformer_block(x, pp):
    B, S, D = x.shape
    x2 = x.reshape(B * S, D)         # fold batch into sublanes (free, host-side)
    out = pl.pallas_call(
        transformer_block_kernel,
        out_shape=jax.ShapeDtypeStruct((B * S, D), jnp.float32),
        # grid-less single invocation: all operands (~0.2 MiB) resident in VMEM.
        # NOTE: if multiple blocks are stacked / shapes grow, fuse layers into one
        # call or add a row-parallel grid (v7x second TensorCore); not worth it at 16 rows.
        compiler_params=pltpu.CompilerParams(vmem_limit_bytes=8 * 1024 * 1024),
    )(
        x2, pp["norm_w"], pp["wqkv"], pp["bqkv"], pp["wo"], pp["bo"],
        pp["attn_mask"], pp["ffn_norm"], pp["ffn_w1"], pp["ffn_b1"],
        pp["ffn_w2"], pp["ffn_b2"],
    )
    return out.reshape(B, S, D)


def init_params(key):
    ks = jax.random.split(key, 12)
    scale = 0.02

    def nrm(k, shape):
        return (scale * jax.random.normal(k, shape)).astype(jnp.float32)

    return dict(
        norm_w=jnp.ones((1, D_MODEL), jnp.float32),          # pre-attn RMSNorm weight
        wq=nrm(ks[0], (D_MODEL, D_MODEL)),
        wk=nrm(ks[1], (D_MODEL, D_MODEL)),
        wv=nrm(ks[2], (D_MODEL, D_MODEL)),
        bq=nrm(ks[3], (1, D_MODEL)),
        bk=nrm(ks[4], (1, D_MODEL)),
        bv=nrm(ks[5], (1, D_MODEL)),
        wo=nrm(ks[6], (D_MODEL, D_MODEL)),
        bo=nrm(ks[7], (1, D_MODEL)),
        ffn_norm=jnp.ones((3, 1, D_MODEL), jnp.float32),      # 3 stacked FFN RMSNorm weights
        ffn_w1=nrm(ks[8], (3, D_MODEL, 2 * DIM_FF)),
        ffn_b1=nrm(ks[9], (3, 1, 2 * DIM_FF)),
        ffn_w2=nrm(ks[10], (3, DIM_FF, D_MODEL)),
        ffn_b2=nrm(ks[11], (3, 1, D_MODEL)),
    )


def reference(x, p):
    """Pure-JAX reference with identical semantics (uses the UNFUSED weights)."""
    def rms(v, w):
        return v * lax.rsqrt(jnp.mean(v * v, -1, keepdims=True) + EPS) * w

    out = []
    for b in range(x.shape[0]):
        xb = x[b]
        ai = rms(xb, p["norm_w"])
        q = ai @ p["wq"] + p["bq"]
        k = ai @ p["wk"] + p["bk"]
        v = ai @ p["wv"] + p["bv"]
        heads = []
        for h in range(NHEAD):
            sl = slice(h * HEAD_DIM, (h + 1) * HEAD_DIM)
            s = (q[:, sl] / math.sqrt(HEAD_DIM)) @ k[:, sl].T
            pmat = jax.nn.softmax(s, axis=-1)
            heads.append(pmat @ v[:, sl])
        attn = jnp.concatenate(heads, -1) @ p["wo"] + p["bo"]
        x1 = xb + attn
        hcur = x1
        for i in range(3):
            hcur = rms(hcur, p["ffn_norm"][i])
            y = hcur @ p["ffn_w1"][i] + p["ffn_b1"][i]
            a, g = y[:, :DIM_FF], y[:, DIM_FF:]
            hcur = a * (g * jax.nn.sigmoid(g))
            hcur = hcur @ p["ffn_w2"][i] + p["ffn_b2"][i]
        out.append(x1 + hcur)
    return jnp.stack(out, 0)


if __name__ == "__main__":
    key = jax.random.PRNGKey(0)
    kx, kp = jax.random.split(key)
    x = jax.random.normal(kx, (BATCH, SEQ, D_MODEL), dtype=jnp.float32)
    params = init_params(kp)
    packed = prepare_params(params)      # one-time packing, outside the forward path

    y = transformer_block(x, packed)
    y = jax.block_until_ready(y)

    y_ref = reference(x, params)
    assert y.shape == (BATCH, SEQ, D_MODEL)
    assert jnp.allclose(y, y_ref, atol=2e-4, rtol=2e-4), "mismatch vs reference"
    print("KERNEL_OK")
</pallas_src>

<mosaic_0001>
module attributes {stable_mosaic.version = 11 : i64} {
  func.func @transformer_block_kernel(%arg0: memref<16x32xf32, #tpu.memory_space<vmem>>, %arg1: memref<1x32xf32, #tpu.memory_space<vmem>>, %arg2: memref<32x96xf32, #tpu.memory_space<vmem>>, %arg3: memref<1x96xf32, #tpu.memory_space<vmem>>, %arg4: memref<32x32xf32, #tpu.memory_space<vmem>>, %arg5: memref<1x32xf32, #tpu.memory_space<vmem>>, %arg6: memref<16x16xf32, #tpu.memory_space<vmem>>, %arg7: memref<3x1x32xf32, #tpu.memory_space<vmem>>, %arg8: memref<3x32x128xf32, #tpu.memory_space<vmem>>, %arg9: memref<3x1x128xf32, #tpu.memory_space<vmem>>, %arg10: memref<3x64x32xf32, #tpu.memory_space<vmem>>, %arg11: memref<3x1x32xf32, #tpu.memory_space<vmem>>, %arg12: memref<16x32xf32, #tpu.memory_space<vmem>>) attributes {dimension_semantics = [], scalar_prefetch = 0 : i64, scratch_operands = 0 : i64, tpu.core_type = #tpu.core_type<tc>} {
    %c0 = arith.constant 0 : index
    %c0_0 = arith.constant 0 : index
    %0 = vector.load %arg0[%c0, %c0_0] : memref<16x32xf32, #tpu.memory_space<vmem>>, vector<16x32xf32>
    %c0_1 = arith.constant 0 : index
    %c0_2 = arith.constant 0 : index
    %1 = vector.load %arg1[%c0_1, %c0_2] : memref<1x32xf32, #tpu.memory_space<vmem>>, vector<1x32xf32>
    %2 = arith.mulf %0, %0 : vector<16x32xf32>
    %cst = arith.constant dense<0.000000e+00> : vector<16xf32>
    %3 = vector.multi_reduction <add>, %2, %cst [1] : vector<16x32xf32> to vector<16xf32>
    %4 = vector.shape_cast %3 : vector<16xf32> to vector<16x1xf32>
    %cst_3 = arith.constant 3.200000e+01 : f32
    %5 = vector.broadcast %cst_3 : f32 to vector<16x1xf32>
    %6 = arith.divf %4, %5 : vector<16x1xf32>
    %cst_4 = arith.constant 1.1920929E-7 : f32
    %7 = vector.broadcast %cst_4 : f32 to vector<16x1xf32>
    %8 = arith.addf %6, %7 : vector<16x1xf32>
    %9 = math.rsqrt %8 : vector<16x1xf32>
    %10 = vector.broadcast %9 : vector<16x1xf32> to vector<16x32xf32>
    %11 = arith.mulf %0, %10 : vector<16x32xf32>
    %12 = vector.broadcast %1 : vector<1x32xf32> to vector<16x32xf32>
    %13 = arith.mulf %11, %12 : vector<16x32xf32>
    %c0_5 = arith.constant 0 : index
    %c0_6 = arith.constant 0 : index
    %14 = vector.load %arg2[%c0_5, %c0_6] : memref<32x96xf32, #tpu.memory_space<vmem>>, vector<32x96xf32>
    %cst_7 = arith.constant dense<0.000000e+00> : vector<16x96xf32>
    %15 = tpu.matmul %13, %14, %cst_7 {dimension_numbers = #tpu.dot_dimension_numbers<[1], [0], [0], [1], [0, 0, 1, 1], [], []>} : vector<16x32xf32>, vector<32x96xf32>, vector<16x96xf32> -> vector<16x96xf32>
    %c0_8 = arith.constant 0 : index
    %c0_9 = arith.constant 0 : index
    %16 = vector.load %arg3[%c0_8, %c0_9] : memref<1x96xf32, #tpu.memory_space<vmem>>, vector<1x96xf32>
    %17 = vector.broadcast %16 : vector<1x96xf32> to vector<16x96xf32>
    %18 = arith.addf %15, %17 : vector<16x96xf32>
    %19 = vector.extract_strided_slice %18 {offsets = [0, 0], sizes = [16, 8], strides = [1, 1]} : vector<16x96xf32> to vector<16x8xf32>
    %20 = vector.extract_strided_slice %18 {offsets = [0, 8], sizes = [16, 8], strides = [1, 1]} : vector<16x96xf32> to vector<16x8xf32>
    %21 = vector.extract_strided_slice %18 {offsets = [0, 16], sizes = [16, 8], strides = [1, 1]} : vector<16x96xf32> to vector<16x8xf32>
    %22 = vector.extract_strided_slice %18 {offsets = [0, 24], sizes = [16, 8], strides = [1, 1]} : vector<16x96xf32> to vector<16x8xf32>
    %23 = vector.shape_cast %19 : vector<16x8xf32> to vector<1x16x8xf32>
    %24 = vector.shape_cast %20 : vector<16x8xf32> to vector<1x16x8xf32>
    %25 = vector.shape_cast %21 : vector<16x8xf32> to vector<1x16x8xf32>
    %26 = vector.shape_cast %22 : vector<16x8xf32> to vector<1x16x8xf32>
    %27 = tpu.concatenate %23, %24, %25, %26 in 0 : vector<1x16x8xf32>, vector<1x16x8xf32>, vector<1x16x8xf32>, vector<1x16x8xf32> -> vector<4x16x8xf32>
    %28 = vector.extract_strided_slice %18 {offsets = [0, 32], sizes = [16, 8], strides = [1, 1]} : vector<16x96xf32> to vector<16x8xf32>
    %29 = vector.extract_strided_slice %18 {offsets = [0, 40], sizes = [16, 8], strides = [1, 1]} : vector<16x96xf32> to vector<16x8xf32>
    %30 = vector.extract_strided_slice %18 {offsets = [0, 48], sizes = [16, 8], strides = [1, 1]} : vector<16x96xf32> to vector<16x8xf32>
    %31 = vector.extract_strided_slice %18 {offsets = [0, 56], sizes = [16, 8], strides = [1, 1]} : vector<16x96xf32> to vector<16x8xf32>
    %32 = vector.shape_cast %28 : vector<16x8xf32> to vector<1x16x8xf32>
    %33 = vector.shape_cast %29 : vector<16x8xf32> to vector<1x16x8xf32>
    %34 = vector.shape_cast %30 : vector<16x8xf32> to vector<1x16x8xf32>
    %35 = vector.shape_cast %31 : vector<16x8xf32> to vector<1x16x8xf32>
    %36 = tpu.concatenate %32, %33, %34, %35 in 0 : vector<1x16x8xf32>, vector<1x16x8xf32>, vector<1x16x8xf32>, vector<1x16x8xf32> -> vector<4x16x8xf32>
    %37 = vector.extract_strided_slice %18 {offsets = [0, 64], sizes = [16, 8], strides = [1, 1]} : vector<16x96xf32> to vector<16x8xf32>
    %38 = vector.extract_strided_slice %18 {offsets = [0, 72], sizes = [16, 8], strides = [1, 1]} : vector<16x96xf32> to vector<16x8xf32>
    %39 = vector.extract_strided_slice %18 {offsets = [0, 80], sizes = [16, 8], strides = [1, 1]} : vector<16x96xf32> to vector<16x8xf32>
    %40 = vector.extract_strided_slice %18 {offsets = [0, 88], sizes = [16, 8], strides = [1, 1]} : vector<16x96xf32> to vector<16x8xf32>
    %41 = vector.shape_cast %37 : vector<16x8xf32> to vector<1x16x8xf32>
    %42 = vector.shape_cast %38 : vector<16x8xf32> to vector<1x16x8xf32>
    %43 = vector.shape_cast %39 : vector<16x8xf32> to vector<1x16x8xf32>
    %44 = vector.shape_cast %40 : vector<16x8xf32> to vector<1x16x8xf32>
    %45 = tpu.concatenate %41, %42, %43, %44 in 0 : vector<1x16x8xf32>, vector<1x16x8xf32>, vector<1x16x8xf32>, vector<1x16x8xf32> -> vector<4x16x8xf32>
    %cst_10 = arith.constant dense<0.000000e+00> : vector<4x16x16xf32>
    %46 = tpu.matmul %27, %36, %cst_10 {dimension_numbers = #tpu.dot_dimension_numbers<[2], [2], [1], [1], [0, 0, 0, 1, 1, 1], [0], [0]>} : vector<4x16x8xf32>, vector<4x16x8xf32>, vector<4x16x16xf32> -> vector<4x16x16xf32>
    %c0_11 = arith.constant 0 : index
    %c0_12 = arith.constant 0 : index
    %47 = vector.load %arg6[%c0_11, %c0_12] : memref<16x16xf32, #tpu.memory_space<vmem>>, vector<16x16xf32>
    %48 = vector.shape_cast %47 : vector<16x16xf32> to vector<1x16x16xf32>
    %49 = vector.broadcast %48 : vector<1x16x16xf32> to vector<4x16x16xf32>
    %50 = arith.addf %46, %49 : vector<4x16x16xf32>
    %cst_13 = arith.constant dense<0xFF800000> : vector<4x16xf32>
    %51 = vector.multi_reduction <maximumf>, %50, %cst_13 [2] : vector<4x16x16xf32> to vector<4x16xf32>
    %52 = vector.shape_cast %51 : vector<4x16xf32> to vector<4x16x1xf32>
    %53 = vector.broadcast %52 : vector<4x16x1xf32> to vector<4x16x16xf32>
    %54 = arith.subf %50, %53 : vector<4x16x16xf32>
    %55 = math.exp %54 : vector<4x16x16xf32>
    %cst_14 = arith.constant dense<0.000000e+00> : vector<4x16xf32>
    %56 = vector.multi_reduction <add>, %55, %cst_14 [2] : vector<4x16x16xf32> to vector<4x16xf32>
    %57 = vector.shape_cast %56 : vector<4x16xf32> to vector<4x16x1xf32>
    %58 = vector.broadcast %57 : vector<4x16x1xf32> to vector<4x16x16xf32>
    %59 = arith.divf %55, %58 : vector<4x16x16xf32>
    %cst_15 = arith.constant dense<0.000000e+00> : vector<4x16x8xf32>
    %60 = tpu.matmul %59, %45, %cst_15 {dimension_numbers = #tpu.dot_dimension_numbers<[2], [1], [1], [2], [0, 0, 0, 1, 1, 2], [0], [0]>} : vector<4x16x16xf32>, vector<4x16x8xf32>, vector<4x16x8xf32> -> vector<4x16x8xf32>
    %61 = vector.extract_strided_slice %60 {offsets = [0, 0, 0], sizes = [1, 16, 8], strides = [1, 1, 1]} : vector<4x16x8xf32> to vector<1x16x8xf32>
    %62 = vector.shape_cast %61 : vector<1x16x8xf32> to vector<16x8xf32>
    %63 = vector.extract_strided_slice %60 {offsets = [1, 0, 0], sizes = [1, 16, 8], strides = [1, 1, 1]} : vector<4x16x8xf32> to vector<1x16x8xf32>
    %64 = vector.shape_cast %63 : vector<1x16x8xf32> to vector<16x8xf32>
    %65 = vector.extract_strided_slice %60 {offsets = [2, 0, 0], sizes = [1, 16, 8], strides = [1, 1, 1]} : vector<4x16x8xf32> to vector<1x16x8xf32>
    %66 = vector.shape_cast %65 : vector<1x16x8xf32> to vector<16x8xf32>
    %67 = vector.extract_strided_slice %60 {offsets = [3, 0, 0], sizes = [1, 16, 8], strides = [1, 1, 1]} : vector<4x16x8xf32> to vector<1x16x8xf32>
    %68 = vector.shape_cast %67 : vector<1x16x8xf32> to vector<16x8xf32>
    %69 = tpu.concatenate %62, %64, %66, %68 in 1 : vector<16x8xf32>, vector<16x8xf32>, vector<16x8xf32>, vector<16x8xf32> -> vector<16x32xf32>
    %c0_16 = arith.constant 0 : index
    %c0_17 = arith.constant 0 : index
    %70 = vector.load %arg4[%c0_16, %c0_17] : memref<32x32xf32, #tpu.memory_space<vmem>>, vector<32x32xf32>
    %cst_18 = arith.constant dense<0.000000e+00> : vector<16x32xf32>
    %71 = tpu.matmul %69, %70, %cst_18 {dimension_numbers = #tpu.dot_dimension_numbers<[1], [0], [0], [1], [0, 0, 1, 1], [], []>} : vector<16x32xf32>, vector<32x32xf32>, vector<16x32xf32> -> vector<16x32xf32>
    %c0_19 = arith.constant 0 : index
    %c0_20 = arith.constant 0 : index
    %72 = vector.load %arg5[%c0_19, %c0_20] : memref<1x32xf32, #tpu.memory_space<vmem>>, vector<1x32xf32>
    %73 = vector.broadcast %72 : vector<1x32xf32> to vector<16x32xf32>
    %74 = arith.addf %71, %73 : vector<16x32xf32>
    %75 = arith.addf %0, %74 : vector<16x32xf32>
    %c0_21 = arith.constant 0 : index
    %c0_22 = arith.constant 0 : index
    %c0_23 = arith.constant 0 : index
    %76 = vector.load %arg7[%c0_21, %c0_22, %c0_23] : memref<3x1x32xf32, #tpu.memory_space<vmem>>, vector<1x1x32xf32>
    %77 = vector.shape_cast %76 : vector<1x1x32xf32> to vector<1x32xf32>
    %78 = arith.mulf %75, %75 : vector<16x32xf32>
    %cst_24 = arith.constant dense<0.000000e+00> : vector<16xf32>
    %79 = vector.multi_reduction <add>, %78, %cst_24 [1] : vector<16x32xf32> to vector<16xf32>
    %80 = vector.shape_cast %79 : vector<16xf32> to vector<16x1xf32>
    %cst_25 = arith.constant 3.200000e+01 : f32
    %81 = vector.broadcast %cst_25 : f32 to vector<16x1xf32>
    %82 = arith.divf %80, %81 : vector<16x1xf32>
    %cst_26 = arith.constant 1.1920929E-7 : f32
    %83 = vector.broadcast %cst_26 : f32 to vector<16x1xf32>
    %84 = arith.addf %82, %83 : vector<16x1xf32>
    %85 = math.rsqrt %84 : vector<16x1xf32>
    %86 = vector.broadcast %85 : vector<16x1xf32> to vector<16x32xf32>
    %87 = arith.mulf %75, %86 : vector<16x32xf32>
    %88 = vector.broadcast %77 : vector<1x32xf32> to vector<16x32xf32>
    %89 = arith.mulf %87, %88 : vector<16x32xf32>
    %c0_27 = arith.constant 0 : index
    %c0_28 = arith.constant 0 : index
    %c0_29 = arith.constant 0 : index
    %90 = vector.load %arg8[%c0_27, %c0_28, %c0_29] : memref<3x32x128xf32, #tpu.memory_space<vmem>>, vector<1x32x128xf32>
    %91 = vector.shape_cast %90 : vector<1x32x128xf32> to vector<32x128xf32>
    %cst_30 = arith.constant dense<0.000000e+00> : vector<16x128xf32>
    %92 = tpu.matmul %89, %91, %cst_30 {dimension_numbers = #tpu.dot_dimension_numbers<[1], [0], [0], [1], [0, 0, 1, 1], [], []>} : vector<16x32xf32>, vector<32x128xf32>, vector<16x128xf32> -> vector<16x128xf32>
    %c0_31 = arith.constant 0 : index
    %c0_32 = arith.constant 0 : index
    %c0_33 = arith.constant 0 : index
    %93 = vector.load %arg9[%c0_31, %c0_32, %c0_33] : memref<3x1x128xf32, #tpu.memory_space<vmem>>, vector<1x1x128xf32>
    %94 = vector.shape_cast %93 : vector<1x1x128xf32> to vector<1x128xf32>
    %95 = vector.broadcast %94 : vector<1x128xf32> to vector<16x128xf32>
    %96 = arith.addf %92, %95 : vector<16x128xf32>
    %97 = vector.extract_strided_slice %96 {offsets = [0, 0], sizes = [16, 64], strides = [1, 1]} : vector<16x128xf32> to vector<16x64xf32>
    %98 = vector.extract_strided_slice %96 {offsets = [0, 64], sizes = [16, 64], strides = [1, 1]} : vector<16x128xf32> to vector<16x64xf32>
    %99 = arith.negf %98 : vector<16x64xf32>
    %100 = math.exp %99 : vector<16x64xf32>
    %cst_34 = arith.constant 1.000000e+00 : f32
    %101 = vector.broadcast %cst_34 : f32 to vector<16x64xf32>
    %102 = arith.addf %101, %100 : vector<16x64xf32>
    %103 = arith.divf %101, %102 : vector<16x64xf32>
    %104 = arith.mulf %98, %103 : vector<16x64xf32>
    %105 = arith.mulf %97, %104 : vector<16x64xf32>
    %c0_35 = arith.constant 0 : index
    %c0_36 = arith.constant 0 : index
    %c0_37 = arith.constant 0 : index
    %106 = vector.load %arg10[%c0_35, %c0_36, %c0_37] : memref<3x64x32xf32, #tpu.memory_space<vmem>>, vector<1x64x32xf32>
    %107 = vector.shape_cast %106 : vector<1x64x32xf32> to vector<64x32xf32>
    %cst_38 = arith.constant dense<0.000000e+00> : vector<16x32xf32>
    %108 = tpu.matmul %105, %107, %cst_38 {dimension_numbers = #tpu.dot_dimension_numbers<[1], [0], [0], [1], [0, 0, 1, 1], [], []>} : vector<16x64xf32>, vector<64x32xf32>, vector<16x32xf32> -> vector<16x32xf32>
    %c0_39 = arith.constant 0 : index
    %c0_40 = arith.constant 0 : index
    %c0_41 = arith.constant 0 : index
    %109 = vector.load %arg11[%c0_39, %c0_40, %c0_41] : memref<3x1x32xf32, #tpu.memory_space<vmem>>, vector<1x1x32xf32>
    %110 = vector.shape_cast %109 : vector<1x1x32xf32> to vector<1x32xf32>
    %111 = vector.broadcast %110 : vector<1x32xf32> to vector<16x32xf32>
    %112 = arith.addf %108, %111 : vector<16x32xf32>
    %c1 = arith.constant 1 : index
    %c0_42 = arith.constant 0 : index
    %c0_43 = arith.constant 0 : index
    %113 = vector.load %arg7[%c1, %c0_42, %c0_43] : memref<3x1x32xf32, #tpu.memory_space<vmem>>, vector<1x1x32xf32>
    %114 = vector.shape_cast %113 : vector<1x1x32xf32> to vector<1x32xf32>
    %115 = arith.mulf %112, %112 : vector<16x32xf32>
    %cst_44 = arith.constant dense<0.000000e+00> : vector<16xf32>
    %116 = vector.multi_reduction <add>, %115, %cst_44 [1] : vector<16x32xf32> to vector<16xf32>
    %117 = vector.shape_cast %116 : vector<16xf32> to vector<16x1xf32>
    %cst_45 = arith.constant 3.200000e+01 : f32
    %118 = vector.broadcast %cst_45 : f32 to vector<16x1xf32>
    %119 = arith.divf %117, %118 : vector<16x1xf32>
    %cst_46 = arith.constant 1.1920929E-7 : f32
    %120 = vector.broadcast %cst_46 : f32 to vector<16x1xf32>
    %121 = arith.addf %119, %120 : vector<16x1xf32>
    %122 = math.rsqrt %121 : vector<16x1xf32>
    %123 = vector.broadcast %122 : vector<16x1xf32> to vector<16x32xf32>
    %124 = arith.mulf %112, %123 : vector<16x32xf32>
    %125 = vector.broadcast %114 : vector<1x32xf32> to vector<16x32xf32>
    %126 = arith.mulf %124, %125 : vector<16x32xf32>
    %c1_47 = arith.constant 1 : index
    %c0_48 = arith.constant 0 : index
    %c0_49 = arith.constant 0 : index
    %127 = vector.load %arg8[%c1_47, %c0_48, %c0_49] : memref<3x32x128xf32, #tpu.memory_space<vmem>>, vector<1x32x128xf32>
    %128 = vector.shape_cast %127 : vector<1x32x128xf32> to vector<32x128xf32>
    %cst_50 = arith.constant dense<0.000000e+00> : vector<16x128xf32>
    %129 = tpu.matmul %126, %128, %cst_50 {dimension_numbers = #tpu.dot_dimension_numbers<[1], [0], [0], [1], [0, 0, 1, 1], [], []>} : vector<16x32xf32>, vector<32x128xf32>, vector<16x128xf32> -> vector<16x128xf32>
    %c1_51 = arith.constant 1 : index
    %c0_52 = arith.constant 0 : index
    %c0_53 = arith.constant 0 : index
    %130 = vector.load %arg9[%c1_51, %c0_52, %c0_53] : memref<3x1x128xf32, #tpu.memory_space<vmem>>, vector<1x1x128xf32>
    %131 = vector.shape_cast %130 : vector<1x1x128xf32> to vector<1x128xf32>
    %132 = vector.broadcast %131 : vector<1x128xf32> to vector<16x128xf32>
    %133 = arith.addf %129, %132 : vector<16x128xf32>
    %134 = vector.extract_strided_slice %133 {offsets = [0, 0], sizes = [16, 64], strides = [1, 1]} : vector<16x128xf32> to vector<16x64xf32>
    %135 = vector.extract_strided_slice %133 {offsets = [0, 64], sizes = [16, 64], strides = [1, 1]} : vector<16x128xf32> to vector<16x64xf32>
    %136 = arith.negf %135 : vector<16x64xf32>
    %137 = math.exp %136 : vector<16x64xf32>
    %cst_54 = arith.constant 1.000000e+00 : f32
    %138 = vector.broadcast %cst_54 : f32 to vector<16x64xf32>
    %139 = arith.addf %138, %137 : vector<16x64xf32>
    %140 = arith.divf %138, %139 : vector<16x64xf32>
    %141 = arith.mulf %135, %140 : vector<16x64xf32>
    %142 = arith.mulf %134, %141 : vector<16x64xf32>
    %c1_55 = arith.constant 1 : index
    %c0_56 = arith.constant 0 : index
    %c0_57 = arith.constant 0 : index
    %143 = vector.load %arg10[%c1_55, %c0_56, %c0_57] : memref<3x64x32xf32, #tpu.memory_space<vmem>>, vector<1x64x32xf32>
    %144 = vector.shape_cast %143 : vector<1x64x32xf32> to vector<64x32xf32>
    %cst_58 = arith.constant dense<0.000000e+00> : vector<16x32xf32>
    %145 = tpu.matmul %142, %144, %cst_58 {dimension_numbers = #tpu.dot_dimension_numbers<[1], [0], [0], [1], [0, 0, 1, 1], [], []>} : vector<16x64xf32>, vector<64x32xf32>, vector<16x32xf32> -> vector<16x32xf32>
    %c1_59 = arith.constant 1 : index
    %c0_60 = arith.constant 0 : index
    %c0_61 = arith.constant 0 : index
    %146 = vector.load %arg11[%c1_59, %c0_60, %c0_61] : memref<3x1x32xf32, #tpu.memory_space<vmem>>, vector<1x1x32xf32>
    %147 = vector.shape_cast %146 : vector<1x1x32xf32> to vector<1x32xf32>
    %148 = vector.broadcast %147 : vector<1x32xf32> to vector<16x32xf32>
    %149 = arith.addf %145, %148 : vector<16x32xf32>
    %c2 = arith.constant 2 : index
    %c0_62 = arith.constant 0 : index
    %c0_63 = arith.constant 0 : index
    %150 = vector.load %arg7[%c2, %c0_62, %c0_63] : memref<3x1x32xf32, #tpu.memory_space<vmem>>, vector<1x1x32xf32>
    %151 = vector.shape_cast %150 : vector<1x1x32xf32> to vector<1x32xf32>
    %152 = arith.mulf %149, %149 : vector<16x32xf32>
    %cst_64 = arith.constant dense<0.000000e+00> : vector<16xf32>
    %153 = vector.multi_reduction <add>, %152, %cst_64 [1] : vector<16x32xf32> to vector<16xf32>
    %154 = vector.shape_cast %153 : vector<16xf32> to vector<16x1xf32>
    %cst_65 = arith.constant 3.200000e+01 : f32
    %155 = vector.broadcast %cst_65 : f32 to vector<16x1xf32>
    %156 = arith.divf %154, %155 : vector<16x1xf32>
    %cst_66 = arith.constant 1.1920929E-7 : f32
    %157 = vector.broadcast %cst_66 : f32 to vector<16x1xf32>
    %158 = arith.addf %156, %157 : vector<16x1xf32>
    %159 = math.rsqrt %158 : vector<16x1xf32>
    %160 = vector.broadcast %159 : vector<16x1xf32> to vector<16x32xf32>
    %161 = arith.mulf %149, %160 : vector<16x32xf32>
    %162 = vector.broadcast %151 : vector<1x32xf32> to vector<16x32xf32>
    %163 = arith.mulf %161, %162 : vector<16x32xf32>
    %c2_67 = arith.constant 2 : index
    %c0_68 = arith.constant 0 : index
    %c0_69 = arith.constant 0 : index
    %164 = vector.load %arg8[%c2_67, %c0_68, %c0_69] : memref<3x32x128xf32, #tpu.memory_space<vmem>>, vector<1x32x128xf32>
    %165 = vector.shape_cast %164 : vector<1x32x128xf32> to vector<32x128xf32>
    %cst_70 = arith.constant dense<0.000000e+00> : vector<16x128xf32>
    %166 = tpu.matmul %163, %165, %cst_70 {dimension_numbers = #tpu.dot_dimension_numbers<[1], [0], [0], [1], [0, 0, 1, 1], [], []>} : vector<16x32xf32>, vector<32x128xf32>, vector<16x128xf32> -> vector<16x128xf32>
    %c2_71 = arith.constant 2 : index
    %c0_72 = arith.constant 0 : index
    %c0_73 = arith.constant 0 : index
    %167 = vector.load %arg9[%c2_71, %c0_72, %c0_73] : memref<3x1x128xf32, #tpu.memory_space<vmem>>, vector<1x1x128xf32>
    %168 = vector.shape_cast %167 : vector<1x1x128xf32> to vector<1x128xf32>
    %169 = vector.broadcast %168 : vector<1x128xf32> to vector<16x128xf32>
    %170 = arith.addf %166, %169 : vector<16x128xf32>
    %171 = vector.extract_strided_slice %170 {offsets = [0, 0], sizes = [16, 64], strides = [1, 1]} : vector<16x128xf32> to vector<16x64xf32>
    %172 = vector.extract_strided_slice %170 {offsets = [0, 64], sizes = [16, 64], strides = [1, 1]} : vector<16x128xf32> to vector<16x64xf32>
    %173 = arith.negf %172 : vector<16x64xf32>
    %174 = math.exp %173 : vector<16x64xf32>
    %cst_74 = arith.constant 1.000000e+00 : f32
    %175 = vector.broadcast %cst_74 : f32 to vector<16x64xf32>
    %176 = arith.addf %175, %174 : vector<16x64xf32>
    %177 = arith.divf %175, %176 : vector<16x64xf32>
    %178 = arith.mulf %172, %177 : vector<16x64xf32>
    %179 = arith.mulf %171, %178 : vector<16x64xf32>
    %c2_75 = arith.constant 2 : index
    %c0_76 = arith.constant 0 : index
    %c0_77 = arith.constant 0 : index
    %180 = vector.load %arg10[%c2_75, %c0_76, %c0_77] : memref<3x64x32xf32, #tpu.memory_space<vmem>>, vector<1x64x32xf32>
    %181 = vector.shape_cast %180 : vector<1x64x32xf32> to vector<64x32xf32>
    %cst_78 = arith.constant dense<0.000000e+00> : vector<16x32xf32>
    %182 = tpu.matmul %179, %181, %cst_78 {dimension_numbers = #tpu.dot_dimension_numbers<[1], [0], [0], [1], [0, 0, 1, 1], [], []>} : vector<16x64xf32>, vector<64x32xf32>, vector<16x32xf32> -> vector<16x32xf32>
    %c2_79 = arith.constant 2 : index
    %c0_80 = arith.constant 0 : index
    %c0_81 = arith.constant 0 : index
    %183 = vector.load %arg11[%c2_79, %c0_80, %c0_81] : memref<3x1x32xf32, #tpu.memory_space<vmem>>, vector<1x1x32xf32>
    %184 = vector.shape_cast %183 : vector<1x1x32xf32> to vector<1x32xf32>
    %185 = vector.broadcast %184 : vector<1x32xf32> to vector<16x32xf32>
    %186 = arith.addf %182, %185 : vector<16x32xf32>
    %187 = arith.addf %75, %186 : vector<16x32xf32>
    %c0_82 = arith.constant 0 : index
    %c0_83 = arith.constant 0 : index
    %188 = vector.load %arg12[%c0_82, %c0_83] : memref<16x32xf32, #tpu.memory_space<vmem>>, vector<16x32xf32>
    tpu.vector_store %arg12[%c0_82, %c0_83], %187 {strides = array<i32>} : memref<16x32xf32, #tpu.memory_space<vmem>>, vector<16x32xf32>,
    return
  }
}

</mosaic_0001>

<llo_original>
// kernel: tpu_custom_call.1
$region0: #{tpu_custom_call.1}
  #allocation0 [shape = 'u32[]', space=smem, size = 0x4, offset = 0x4, fixed_abs, tag = 'smem constant byte address 0x4 - core index']
  #allocation1 [shape = 'u32[72,128]{1,0:T(1,128)}', space=vmem, size = 0x9000, scoped, tag = 'internal scratch']
  %s0 = inlined_call_operand.vmem [shape: f32[16,32], index: 0, kind: input, shape index: {}]
  %s1 = inlined_call_operand.vmem [shape: f32[1,32], index: 1, kind: input, shape index: {}]
  %s2 = inlined_call_operand.vmem [shape: f32[32,96], index: 2, kind: input, shape index: {}]
  %s3 = inlined_call_operand.vmem [shape: f32[1,96], index: 3, kind: input, shape index: {}]
  %s4 = inlined_call_operand.vmem [shape: f32[32,32], index: 4, kind: input, shape index: {}]
  %s5 = inlined_call_operand.vmem [shape: f32[1,32], index: 5, kind: input, shape index: {}]
  %s6 = inlined_call_operand.vmem [shape: f32[16,16], index: 6, kind: input, shape index: {}]
  %s7 = inlined_call_operand.vmem [shape: f32[3,1,32], index: 7, kind: input, shape index: {}]
  %s8 = inlined_call_operand.vmem [shape: f32[3,32,128], index: 8, kind: input, shape index: {}]
  %s9 = inlined_call_operand.vmem [shape: f32[3,1,128], index: 9, kind: input, shape index: {}]
  %s10 = inlined_call_operand.vmem [shape: f32[3,64,32], index: 10, kind: input, shape index: {}]
  %s11 = inlined_call_operand.vmem [shape: f32[3,1,32], index: 11, kind: input, shape index: {}]
  %s12 = inlined_call_operand.hbm [shape: f32[16,32], index: 12, kind: output, shape index: {}]
  %s13 = sld [smem:[#allocation0]]
  $region58: #{tpu_custom_call.1} parent=0
    _
  %s15 = ssub.s32 1, %s13
  %s16 = scalar_select 0, %s15, %s13
  $region1: #{tpu_custom_call.1} parent=0
    #allocation2 [shape = 'u8[8192]{0}', space=vmem, size = 0x2000, scoped, tag = 'output window, operand 0, single buffered']
    #allocation3 [shape = 's32[1]{0}', space=sflag, size = 0x4, scoped, tag = 'scoped memory for tpu_custom_call.1']
    %17 = vsyncpa [#allocation3], 0
    // Predicated region
    $region2: #{tpu_custom_call.1} parent=1 // pred_check
      _
    $region3: #{tpu_custom_call.1} parent=1 // pred_check_branch
      %19 = sbr.rel (0) target = $region5
    $region4: #{tpu_custom_call.1} parent=1 // pred_region
      _
    $region5: #{tpu_custom_call.1} parent=1 // pred_fallthru
      _
    // Predicated region
    $region6: #{tpu_custom_call.1} parent=1 // pred_check
      _
    $region7: #{tpu_custom_call.1} parent=1 // pred_check_branch
      %21 = sbr.rel (0) target = $region9
    $region8: #{tpu_custom_call.1} parent=1 // pred_region
      _
    $region9: #{tpu_custom_call.1} parent=1 // pred_fallthru
      _
    // Predicated region
    $region10: #{tpu_custom_call.1} parent=1 // pred_check
      _
    $region11: #{tpu_custom_call.1} parent=1 // pred_check_branch
      %23 = sbr.rel (0) target = $region13
    $region12: #{tpu_custom_call.1} parent=1 // pred_region
      _
    $region13: #{tpu_custom_call.1} parent=1 // pred_fallthru
      _
    // Predicated region
    $region14: #{tpu_custom_call.1} parent=1 // pred_check
      _
    $region15: #{tpu_custom_call.1} parent=1 // pred_check_branch
      %25 = sbr.rel (0) target = $region17
    $region16: #{tpu_custom_call.1} parent=1 // pred_region
      _
    $region17: #{tpu_custom_call.1} parent=1 // pred_fallthru
      _
    // Predicated region
    $region18: #{tpu_custom_call.1} parent=1 // pred_check
      _
    $region19: #{tpu_custom_call.1} parent=1 // pred_check_branch
      %27 = sbr.rel (0) target = $region21
    $region20: #{tpu_custom_call.1} parent=1 // pred_region
      _
    $region21: #{tpu_custom_call.1} parent=1 // pred_fallthru
      _
    // Predicated region
    $region22: #{tpu_custom_call.1} parent=1 // pred_check
      _
    $region23: #{tpu_custom_call.1} parent=1 // pred_check_branch
      %29 = sbr.rel (0) target = $region25
    $region24: #{tpu_custom_call.1} parent=1 // pred_region
      _
    $region25: #{tpu_custom_call.1} parent=1 // pred_fallthru
      _
    // Predicated region
    $region26: #{tpu_custom_call.1} parent=1 // pred_check
      _
    $region27: #{tpu_custom_call.1} parent=1 // pred_check_branch
      %31 = sbr.rel (0) target = $region29
    $region28: #{tpu_custom_call.1} parent=1 // pred_region
      _
    $region29: #{tpu_custom_call.1} parent=1 // pred_fallthru
      _
    // Predicated region
    $region30: #{tpu_custom_call.1} parent=1 // pred_check
      _
    $region31: #{tpu_custom_call.1} parent=1 // pred_check_branch
      %33 = sbr.rel (0) target = $region33
    $region32: #{tpu_custom_call.1} parent=1 // pred_region
      _
    $region33: #{tpu_custom_call.1} parent=1 // pred_fallthru
      _
    // Predicated region
    $region34: #{tpu_custom_call.1} parent=1 // pred_check
      _
    $region35: #{tpu_custom_call.1} parent=1 // pred_check_branch
      %35 = sbr.rel (0) target = $region37
    $region36: #{tpu_custom_call.1} parent=1 // pred_region
      _
    $region37: #{tpu_custom_call.1} parent=1 // pred_fallthru
      _
    // Predicated region
    $region38: #{tpu_custom_call.1} parent=1 // pred_check
      _
    $region39: #{tpu_custom_call.1} parent=1 // pred_check_branch
      %37 = sbr.rel (0) target = $region41
    $region40: #{tpu_custom_call.1} parent=1 // pred_region
      _
    $region41: #{tpu_custom_call.1} parent=1 // pred_fallthru
      _
    // Predicated region
    $region42: #{tpu_custom_call.1} parent=1 // pred_check
      _
    $region43: #{tpu_custom_call.1} parent=1 // pred_check_branch
      %39 = sbr.rel (0) target = $region45
    $region44: #{tpu_custom_call.1} parent=1 // pred_region
      _
    $region45: #{tpu_custom_call.1} parent=1 // pred_fallthru
      _
    // Predicated region
    $region46: #{tpu_custom_call.1} parent=1 // pred_check
      _
    $region47: #{tpu_custom_call.1} parent=1 // pred_check_branch
      %41 = sbr.rel (0) target = $region49
    $region48: #{tpu_custom_call.1} parent=1 // pred_region
      _
    $region49: #{tpu_custom_call.1} parent=1 // pred_fallthru
      _
    %v42 = vld [vmem:[%s0] sm:$0xff]
    %v43 = vld [vmem:[%s0 + $0x8] sm:$0xff]
    %v44 = vld [vmem:[%s1] sm:$0x1]
    %v45 = vmul.f32 %v42, %v42
    %v46 = vmul.f32 %v43, %v43
    %vm47 = vcmask 261120
    %v48 = vsel %vm47, %v45, 0.0
    %49 = vadd.xlane.f32.xlu0 %v48
    %v50 = vpop.xlane.xlu0 %49
    %v51 = vsel %vm47, %v46, 0.0
    %52 = vadd.xlane.f32.xlu0 %v51
    %v53 = vpop.xlane.xlu0 %52
    %v54 = vrcp.pop 32.0
    %v55 = vmul.f32 32.0, %v54
    %v56 = vsub.f32 1.0, %v55
    %v57 = vmul.f32 %v54, %v56
    %v58 = vadd.f32 %v54, %v57
    %vm59 = vweird.f32 %v54
    %v60 = vsel %vm59, %v54, %v58
    %v61 = vmul.f32 %v50, %v60
    %v62 = vmul.f32 %v53, %v60
    %v63 = vadd.f32 %v61, 1.1920929e-07
    %v64 = vadd.f32 %v62, 1.1920929e-07
    %v65 = vrsqrt.pop %v63
    %v66 = vmul.f32 %v65, %v63
    %v67 = vmul.f32 %v66, %v65
    %v68 = vmul.f32 0.5, %v67
    %v69 = vsub.f32 1.5, %v68
    %v70 = vmul.f32 %v65, %v69
    %vm71 = vweird.f32 %v63
    %vm72 = vweird.f32 %v65
    %vm73 = vmor %vm71, %vm72
    %v74 = vsel %vm73, %v65, %v70
    %v75 = vrsqrt.pop %v64
    %v76 = vmul.f32 %v75, %v64
    %v77 = vmul.f32 %v76, %v75
    %v78 = vmul.f32 0.5, %v77
    %v79 = vsub.f32 1.5, %v78
    %v80 = vmul.f32 %v75, %v79
    %vm81 = vweird.f32 %v64
    %vm82 = vweird.f32 %v75
    %vm83 = vmor %vm81, %vm82
    %v84 = vsel %vm83, %v75, %v80
    %v85 = vmul.f32 %v42, %v74
    %v86 = vmul.f32 %v43, %v84
    %v88 = vperm.slane %v44, 0
    %v90 = vmul.f32 %v85, %v88
    %v91 = vmul.f32 %v86, %v88
    %v92 = vld [vmem:[%s2] sm:$0xff]
    %v93 = vld [vmem:[%s2 + $0x8] sm:$0xff]
    %v94 = vld [vmem:[%s2 + $0x10] sm:$0xff]
    %v95 = vld [vmem:[%s2 + $0x18] sm:$0xff]
    %v96 = vld [vmem:[%s3] sm:$0x1]
    %v98 = vperm.slane %v96, 0
    %v101 = vsel %vm47, %v90, 0
    %v104 = vsel %vm47, %v91, 0
    %106 = vmatpush.msra.mxu0 0.0
    %107 = vmatpush.msra.mxu0 0.0
    %108 = vmatpush.msra.mxu0 0.0
    %109 = vmatpush.msra.mxu0 0.0
    %110 = vmatpush.msra.mxu0 0.0
    %111 = vmatpush.msra.mxu0 0.0
    %112 = vmatpush.msra.mxu0 0.0
    %113 = vmatpush.msra.mxu0 0.0
    %114 = vmatpush.msra.mxu0 0.0
    %115 = vmatpush.msra.mxu0 0.0
    %116 = vmatpush.msra.mxu0 0.0
    %117 = vmatpush.msra.mxu0 0.0
    %118 = vmatpush.msra.mxu0 %v95
    %119 = vmatpush.msra.mxu0 %v94
    %120 = vmatpush.msra.mxu0 %v93
    %121 = vmatpush.msra.mxu0 %v92
    %122 = vmatmul.f32.gmra.mxu0 %v101
    %v123 = vpop.f32.mrf.mxu0
    %v124 = vadd.f32 %v98, %v123
    %125 = vmatmul.f32.gmra.mxu0 %v104
    %v126 = vpop.f32.mrf.mxu0
    %v127 = vadd.f32 %v98, %v126
    %128 = vdwg.mxu0
    %131 = vrot.lane.b32.xlu0 %v124, 120
    %v132 = vpop.permute.xlu0 %131
    %133 = vrot.lane.b32.xlu0 %v127, 120
    %v134 = vpop.permute.xlu0 %133
    %135 = vrot.lane.b32.xlu0 %v124, 112
    %v136 = vpop.permute.xlu0 %135
    %137 = vrot.lane.b32.xlu0 %v127, 112
    %v138 = vpop.permute.xlu0 %137
    %139 = vrot.lane.b32.xlu0 %v124, 104
    %v140 = vpop.permute.xlu0 %139
    %141 = vrot.lane.b32.xlu0 %v127, 104
    %v142 = vpop.permute.xlu0 %141
    %v143 = vld [vmem:[%s6] sm:$0xff]
    %v144 = vld [vmem:[%s6 + $0x8] sm:$0xff]
    %145 = vrot.lane.b32.xlu0 %v124, 96
    %v146 = vpop.permute.xlu0 %145
    %147 = vrot.lane.b32.xlu0 %v127, 96
    %v148 = vpop.permute.xlu0 %147
    %vm149 = vcmask 64512
    %v150 = vsel %vm149, %v124, 0
    %v152 = vsel %vm149, %v127, 0
    %v154 = vsel %vm149, %v146, 0
    %v156 = vsel %vm149, %v148, 0
    %158 = vmatpush.xpose.msra.mxu0 0.0
    %159 = vmatpush.xpose.msra.mxu0 0.0
    %160 = vmatpush.xpose.msra.mxu0 0.0
    %161 = vmatpush.xpose.msra.mxu0 0.0
    %162 = vmatpush.xpose.msra.mxu0 0.0
    %163 = vmatpush.xpose.msra.mxu0 0.0
    %164 = vmatpush.xpose.msra.mxu0 0.0
    %165 = vmatpush.xpose.msra.mxu0 0.0
    %166 = vmatpush.xpose.msra.mxu0 0.0
    %167 = vmatpush.xpose.msra.mxu0 0.0
    %168 = vmatpush.xpose.msra.mxu0 0.0
    %169 = vmatpush.xpose.msra.mxu0 0.0
    %170 = vmatpush.xpose.msra.mxu0 0.0
    %171 = vmatpush.xpose.msra.mxu0 0.0
    %172 = vmatpush.xpose.msra.mxu0 %v156
    %173 = vmatpush.xpose.msra.mxu0 %v154
    %174 = vmatmul.f32.gmra.mxu0 %v150
    %v175 = vpop.f32.mrf.mxu0
    %v176 = vadd.f32 %v143, %v175
    %177 = vmatmul.f32.gmra.mxu0 %v152
    %v178 = vpop.f32.mrf.mxu0
    %v179 = vadd.f32 %v144, %v178
    %180 = vdwg.mxu0
    %181 = vrot.lane.b32.xlu0 %v132, 96
    %v182 = vpop.permute.xlu0 %181
    %183 = vrot.lane.b32.xlu0 %v134, 96
    %v184 = vpop.permute.xlu0 %183
    %v185 = vsel %vm149, %v132, 0
    %v187 = vsel %vm149, %v134, 0
    %v189 = vsel %vm149, %v182, 0
    %v191 = vsel %vm149, %v184, 0
    %193 = vmatpush.xpose.msra.mxu0 0.0
    %194 = vmatpush.xpose.msra.mxu0 0.0
    %195 = vmatpush.xpose.msra.mxu0 0.0
    %196 = vmatpush.xpose.msra.mxu0 0.0
    %197 = vmatpush.xpose.msra.mxu0 0.0
    %198 = vmatpush.xpose.msra.mxu0 0.0
    %199 = vmatpush.xpose.msra.mxu0 0.0
    %200 = vmatpush.xpose.msra.mxu0 0.0
    %201 = vmatpush.xpose.msra.mxu0 0.0
    %202 = vmatpush.xpose.msra.mxu0 0.0
    %203 = vmatpush.xpose.msra.mxu0 0.0
    %204 = vmatpush.xpose.msra.mxu0 0.0
    %205 = vmatpush.xpose.msra.mxu0 0.0
    %206 = vmatpush.xpose.msra.mxu0 0.0
    %207 = vmatpush.xpose.msra.mxu0 %v191
    %208 = vmatpush.xpose.msra.mxu0 %v189
    %209 = vmatmul.f32.gmra.mxu0 %v185
    %v210 = vpop.f32.mrf.mxu0
    %v211 = vadd.f32 %v143, %v210
    %212 = vmatmul.f32.gmra.mxu0 %v187
    %v213 = vpop.f32.mrf.mxu0
    %v214 = vadd.f32 %v144, %v213
    %215 = vdwg.mxu0
    %216 = vrot.lane.b32.xlu0 %v136, 96
    %v217 = vpop.permute.xlu0 %216
    %218 = vrot.lane.b32.xlu0 %v138, 96
    %v219 = vpop.permute.xlu0 %218
    %v220 = vsel %vm149, %v136, 0
    %v222 = vsel %vm149, %v138, 0
    %v224 = vsel %vm149, %v217, 0
    %v226 = vsel %vm149, %v219, 0
    %228 = vmatpush.xpose.msra.mxu0 0.0
    %229 = vmatpush.xpose.msra.mxu0 0.0
    %230 = vmatpush.xpose.msra.mxu0 0.0
    %231 = vmatpush.xpose.msra.mxu0 0.0
    %232 = vmatpush.xpose.msra.mxu0 0.0
    %233 = vmatpush.xpose.msra.mxu0 0.0
    %234 = vmatpush.xpose.msra.mxu0 0.0
    %235 = vmatpush.xpose.msra.mxu0 0.0
    %236 = vmatpush.xpose.msra.mxu0 0.0
    %237 = vmatpush.xpose.msra.mxu0 0.0
    %238 = vmatpush.xpose.msra.mxu0 0.0
    %239 = vmatpush.xpose.msra.mxu0 0.0
    %240 = vmatpush.xpose.msra.mxu0 0.0
    %241 = vmatpush.xpose.msra.mxu0 0.0
    %242 = vmatpush.xpose.msra.mxu0 %v226
    %243 = vmatpush.xpose.msra.mxu0 %v224
    %244 = vmatmul.f32.gmra.mxu0 %v220
    %v245 = vpop.f32.mrf.mxu0
    %v246 = vadd.f32 %v143, %v245
    %247 = vmatmul.f32.gmra.mxu0 %v222
    %v248 = vpop.f32.mrf.mxu0
    %v249 = vadd.f32 %v144, %v248
    %250 = vdwg.mxu0
    %251 = vrot.lane.b32.xlu0 %v140, 96
    %v252 = vpop.permute.xlu0 %251
    %253 = vrot.lane.b32.xlu0 %v142, 96
    %v254 = vpop.permute.xlu0 %253
    %v255 = vsel %vm149, %v140, 0
    %v257 = vsel %vm149, %v142, 0
    %v259 = vsel %vm149, %v252, 0
    %v261 = vsel %vm149, %v254, 0
    %263 = vmatpush.xpose.msra.mxu0 0.0
    %264 = vmatpush.xpose.msra.mxu0 0.0
    %265 = vmatpush.xpose.msra.mxu0 0.0
    %266 = vmatpush.xpose.msra.mxu0 0.0
    %267 = vmatpush.xpose.msra.mxu0 0.0
    %268 = vmatpush.xpose.msra.mxu0 0.0
    %269 = vmatpush.xpose.msra.mxu0 0.0
    %270 = vmatpush.xpose.msra.mxu0 0.0
    %271 = vmatpush.xpose.msra.mxu0 0.0
    %272 = vmatpush.xpose.msra.mxu0 0.0
    %273 = vmatpush.xpose.msra.mxu0 0.0
    %274 = vmatpush.xpose.msra.mxu0 0.0
    %275 = vmatpush.xpose.msra.mxu0 0.0
    %276 = vmatpush.xpose.msra.mxu0 0.0
    %277 = vmatpush.xpose.msra.mxu0 %v261
    %278 = vmatpush.xpose.msra.mxu0 %v259
    %279 = vmatmul.f32.gmra.mxu0 %v255
    %v280 = vpop.f32.mrf.mxu0
    %v281 = vadd.f32 %v143, %v280
    %282 = vmatmul.f32.gmra.mxu0 %v257
    %v283 = vpop.f32.mrf.mxu0
    %v284 = vadd.f32 %v144, %v283
    %285 = vdwg.mxu0
    %vm286 = vcmask 130048
    %v287 = vsel %vm286, %v176, -inf
    %288 = vmax.xlane.f32.xlu0 %v287
    %v289 = vpop.xlane.xlu0 %288
    %v290 = vsel %vm286, %v179, -inf
    %291 = vmax.xlane.f32.xlu0 %v290
    %v292 = vpop.xlane.xlu0 %291
    %v293 = vsel %vm286, %v211, -inf
    %294 = vmax.xlane.f32.xlu0 %v293
    %v295 = vpop.xlane.xlu0 %294
    %v296 = vsel %vm286, %v214, -inf
    %297 = vmax.xlane.f32.xlu0 %v296
    %v298 = vpop.xlane.xlu0 %297
    %v299 = vsel %vm286, %v246, -inf
    %300 = vmax.xlane.f32.xlu0 %v299
    %v301 = vpop.xlane.xlu0 %300
    %v302 = vsel %vm286, %v249, -inf
    %303 = vmax.xlane.f32.xlu0 %v302
    %v304 = vpop.xlane.xlu0 %303
    %v305 = vsel %vm286, %v281, -inf
    %306 = vmax.xlane.f32.xlu0 %v305
    %v307 = vpop.xlane.xlu0 %306
    %v308 = vsel %vm286, %v284, -inf
    %309 = vmax.xlane.f32.xlu0 %v308
    %v310 = vpop.xlane.xlu0 %309
    %v311 = vsub.f32 %v176, %v289
    %v312 = vsub.f32 %v179, %v292
    %v313 = vsub.f32 %v211, %v295
    %v314 = vsub.f32 %v214, %v298
    %v315 = vsub.f32 %v246, %v301
    %v316 = vsub.f32 %v249, %v304
    %v317 = vsub.f32 %v281, %v307
    %v318 = vsub.f32 %v284, %v310
    %v319 = vmul.f32 %v311, 1.442695
    %v320 = vpow.pop %v319
    %v321 = vmul.f32 %v312, 1.442695
    %v322 = vpow.pop %v321
    %v323 = vmul.f32 %v313, 1.442695
    %v324 = vpow.pop %v323
    %v325 = vmul.f32 %v314, 1.442695
    %v326 = vpow.pop %v325
    %v327 = vmul.f32 %v315, 1.442695
    %v328 = vpow.pop %v327
    %v329 = vmul.f32 %v316, 1.442695
    %v330 = vpow.pop %v329
    %v331 = vmul.f32 %v317, 1.442695
    %v332 = vpow.pop %v331
    %v333 = vmul.f32 %v318, 1.442695
    %v334 = vpow.pop %v333
    %v335 = vsel %vm286, %v320, 0.0
    %336 = vadd.xlane.f32.xlu0 %v335
    %v337 = vpop.xlane.xlu0 %336
    %v338 = vsel %vm286, %v322, 0.0
    %339 = vadd.xlane.f32.xlu0 %v338
    %v340 = vpop.xlane.xlu0 %339
    %v341 = vsel %vm286, %v324, 0.0
    %342 = vadd.xlane.f32.xlu0 %v341
    %v343 = vpop.xlane.xlu0 %342
    %v344 = vsel %vm286, %v326, 0.0
    %345 = vadd.xlane.f32.xlu0 %v344
    %v346 = vpop.xlane.xlu0 %345
    %v347 = vsel %vm286, %v328, 0.0
    %348 = vadd.xlane.f32.xlu0 %v347
    %v349 = vpop.xlane.xlu0 %348
    %v350 = vsel %vm286, %v330, 0.0
    %351 = vadd.xlane.f32.xlu0 %v350
    %v352 = vpop.xlane.xlu0 %351
    %v353 = vsel %vm286, %v332, 0.0
    %354 = vadd.xlane.f32.xlu0 %v353
    %v355 = vpop.xlane.xlu0 %354
    %v356 = vsel %vm286, %v334, 0.0
    %357 = vadd.xlane.f32.xlu0 %v356
    %v358 = vpop.xlane.xlu0 %357
    %v359 = vrcp.pop %v337
    %v360 = vmul.f32 %v337, %v359
    %v361 = vsub.f32 1.0, %v360
    %v362 = vmul.f32 %v359, %v361
    %v363 = vadd.f32 %v359, %v362
    %vm364 = vweird.f32 %v337
    %vm365 = vweird.f32 %v359
    %vm366 = vmor %vm364, %vm365
    %v367 = vsel %vm366, %v359, %v363
    %v368 = vand.u32 2147483647, %v337
    %vm369 = vcmp.eq.f32.partialorder %v368, 8.507059e+37
    %v370 = vand.u32 %v337, 2147483648
    %v371 = vor.u32 1.1754944e-38, %v370
    %v372 = vsel %vm369, %v371, %v367
    %v373 = vmul.f32 %v320, %v372
    %v374 = vrcp.pop %v340
    %v375 = vmul.f32 %v340, %v374
    %v376 = vsub.f32 1.0, %v375
    %v377 = vmul.f32 %v374, %v376
    %v378 = vadd.f32 %v374, %v377
    %vm379 = vweird.f32 %v340
    %vm380 = vweird.f32 %v374
    %vm381 = vmor %vm379, %vm380
    %v382 = vsel %vm381, %v374, %v378
    %v383 = vand.u32 2147483647, %v340
    %vm384 = vcmp.eq.f32.partialorder %v383, 8.507059e+37
    %v385 = vand.u32 %v340, 2147483648
    %v386 = vor.u32 1.1754944e-38, %v385
    %v387 = vsel %vm384, %v386, %v382
    %v388 = vmul.f32 %v322, %v387
    %v389 = vrcp.pop %v343
    %v390 = vmul.f32 %v343, %v389
    %v391 = vsub.f32 1.0, %v390
    %v392 = vmul.f32 %v389, %v391
    %v393 = vadd.f32 %v389, %v392
    %vm394 = vweird.f32 %v343
    %vm395 = vweird.f32 %v389
    %vm396 = vmor %vm394, %vm395
    %v397 = vsel %vm396, %v389, %v393
    %v398 = vand.u32 2147483647, %v343
    %vm399 = vcmp.eq.f32.partialorder %v398, 8.507059e+37
    %v400 = vand.u32 %v343, 2147483648
    %v401 = vor.u32 1.1754944e-38, %v400
    %v402 = vsel %vm399, %v401, %v397
    %v403 = vmul.f32 %v324, %v402
    %v404 = vrcp.pop %v346
    %v405 = vmul.f32 %v346, %v404
    %v406 = vsub.f32 1.0, %v405
    %v407 = vmul.f32 %v404, %v406
    %v408 = vadd.f32 %v404, %v407
    %vm409 = vweird.f32 %v346
    %vm410 = vweird.f32 %v404
    %vm411 = vmor %vm409, %vm410
    %v412 = vsel %vm411, %v404, %v408
    %v413 = vand.u32 2147483647, %v346
    %vm414 = vcmp.eq.f32.partialorder %v413, 8.507059e+37
    %v415 = vand.u32 %v346, 2147483648
    %v416 = vor.u32 1.1754944e-38, %v415
    %v417 = vsel %vm414, %v416, %v412
    %v418 = vmul.f32 %v326, %v417
    %v419 = vrcp.pop %v349
    %v420 = vmul.f32 %v349, %v419
    %v421 = vsub.f32 1.0, %v420
    %v422 = vmul.f32 %v419, %v421
    %v423 = vadd.f32 %v419, %v422
    %vm424 = vweird.f32 %v349
    %vm425 = vweird.f32 %v419
    %vm426 = vmor %vm424, %vm425
    %v427 = vsel %vm426, %v419, %v423
    %v428 = vand.u32 2147483647, %v349
    %vm429 = vcmp.eq.f32.partialorder %v428, 8.507059e+37
    %v430 = vand.u32 %v349, 2147483648
    %v431 = vor.u32 1.1754944e-38, %v430
    %v432 = vsel %vm429, %v431, %v427
    %v433 = vmul.f32 %v328, %v432
    %v434 = vrcp.pop %v352
    %v435 = vmul.f32 %v352, %v434
    %v436 = vsub.f32 1.0, %v435
    %v437 = vmul.f32 %v434, %v436
    %v438 = vadd.f32 %v434, %v437
    %vm439 = vweird.f32 %v352
    %vm440 = vweird.f32 %v434
    %vm441 = vmor %vm439, %vm440
    %v442 = vsel %vm441, %v434, %v438
    %v443 = vand.u32 2147483647, %v352
    %vm444 = vcmp.eq.f32.partialorder %v443, 8.507059e+37
    %v445 = vand.u32 %v352, 2147483648
    %v446 = vor.u32 1.1754944e-38, %v445
    %v447 = vsel %vm444, %v446, %v442
    %v448 = vmul.f32 %v330, %v447
    %v449 = vrcp.pop %v355
    %v450 = vmul.f32 %v355, %v449
    %v451 = vsub.f32 1.0, %v450
    %v452 = vmul.f32 %v449, %v451
    %v453 = vadd.f32 %v449, %v452
    %vm454 = vweird.f32 %v355
    %vm455 = vweird.f32 %v449
    %vm456 = vmor %vm454, %vm455
    %v457 = vsel %vm456, %v449, %v453
    %v458 = vand.u32 2147483647, %v355
    %vm459 = vcmp.eq.f32.partialorder %v458, 8.507059e+37
    %v460 = vand.u32 %v355, 2147483648
    %v461 = vor.u32 1.1754944e-38, %v460
    %v462 = vsel %vm459, %v461, %v457
    %v463 = vmul.f32 %v332, %v462
    %v464 = vrcp.pop %v358
    %v465 = vmul.f32 %v358, %v464
    %v466 = vsub.f32 1.0, %v465
    %v467 = vmul.f32 %v464, %v466
    %v468 = vadd.f32 %v464, %v467
    %vm469 = vweird.f32 %v358
    %vm470 = vweird.f32 %v464
    %vm471 = vmor %vm469, %vm470
    %v472 = vsel %vm471, %v464, %v468
    %v473 = vand.u32 2147483647, %v358
    %vm474 = vcmp.eq.f32.partialorder %v473, 8.507059e+37
    %v475 = vand.u32 %v358, 2147483648
    %v476 = vor.u32 1.1754944e-38, %v475
    %v477 = vsel %vm474, %v476, %v472
    %v478 = vmul.f32 %v334, %v477
    %479 = vrot.lane.b32.xlu0 %v124, 64
    %v480 = vpop.permute.xlu0 %479
    %481 = vrot.lane.b32.xlu0 %v127, 64
    %v482 = vpop.permute.xlu0 %481
    %v486 = vsel %vm286, %v373, 0
    %v489 = vsel %vm286, %v388, 0
    %491 = vmatpush.msra.mxu0 0.0
    %492 = vmatpush.msra.mxu0 0.0
    %493 = vmatpush.msra.mxu0 0.0
    %494 = vmatpush.msra.mxu0 0.0
    %495 = vmatpush.msra.mxu0 0.0
    %496 = vmatpush.msra.mxu0 0.0
    %497 = vmatpush.msra.mxu0 0.0
    %498 = vmatpush.msra.mxu0 0.0
    %499 = vmatpush.msra.mxu0 0.0
    %500 = vmatpush.msra.mxu0 0.0
    %501 = vmatpush.msra.mxu0 0.0
    %502 = vmatpush.msra.mxu0 0.0
    %503 = vmatpush.msra.mxu0 0.0
    %504 = vmatpush.msra.mxu0 0.0
    %505 = vmatpush.msra.mxu0 %v482
    %506 = vmatpush.msra.mxu0 %v480
    %507 = vmatmul.f32.gmra.mxu0 %v486
    %v508 = vpop.f32.mrf.mxu0
    %v509 = vadd.f32 0.0, %v508
    %510 = vmatmul.f32.gmra.mxu0 %v489
    %v511 = vpop.f32.mrf.mxu0
    %v512 = vadd.f32 0.0, %v511
    %513 = vdwg.mxu0
    %514 = vrot.lane.b32.xlu0 %v132, 64
    %v515 = vpop.permute.xlu0 %514
    %516 = vrot.lane.b32.xlu0 %v134, 64
    %v517 = vpop.permute.xlu0 %516
    %v521 = vsel %vm286, %v403, 0
    %v524 = vsel %vm286, %v418, 0
    %526 = vmatpush.msra.mxu0 0.0
    %527 = vmatpush.msra.mxu0 0.0
    %528 = vmatpush.msra.mxu0 0.0
    %529 = vmatpush.msra.mxu0 0.0
    %530 = vmatpush.msra.mxu0 0.0
    %531 = vmatpush.msra.mxu0 0.0
    %532 = vmatpush.msra.mxu0 0.0
    %533 = vmatpush.msra.mxu0 0.0
    %534 = vmatpush.msra.mxu0 0.0
    %535 = vmatpush.msra.mxu0 0.0
    %536 = vmatpush.msra.mxu0 0.0
    %537 = vmatpush.msra.mxu0 0.0
    %538 = vmatpush.msra.mxu0 0.0
    %539 = vmatpush.msra.mxu0 0.0
    %540 = vmatpush.msra.mxu0 %v517
    %541 = vmatpush.msra.mxu0 %v515
    %542 = vmatmul.f32.gmra.mxu0 %v521
    %v543 = vpop.f32.mrf.mxu0
    %v544 = vadd.f32 0.0, %v543
    %545 = vmatmul.f32.gmra.mxu0 %v524
    %v546 = vpop.f32.mrf.mxu0
    %v547 = vadd.f32 0.0, %v546
    %548 = vdwg.mxu0
    %549 = vrot.lane.b32.xlu0 %v136, 64
    %v550 = vpop.permute.xlu0 %549
    %551 = vrot.lane.b32.xlu0 %v138, 64
    %v552 = vpop.permute.xlu0 %551
    %v556 = vsel %vm286, %v433, 0
    %v559 = vsel %vm286, %v448, 0
    %561 = vmatpush.msra.mxu0 0.0
    %562 = vmatpush.msra.mxu0 0.0
    %563 = vmatpush.msra.mxu0 0.0
    %564 = vmatpush.msra.mxu0 0.0
    %565 = vmatpush.msra.mxu0 0.0
    %566 = vmatpush.msra.mxu0 0.0
    %567 = vmatpush.msra.mxu0 0.0
    %568 = vmatpush.msra.mxu0 0.0
    %569 = vmatpush.msra.mxu0 0.0
    %570 = vmatpush.msra.mxu0 0.0
    %571 = vmatpush.msra.mxu0 0.0
    %572 = vmatpush.msra.mxu0 0.0
    %573 = vmatpush.msra.mxu0 0.0
    %574 = vmatpush.msra.mxu0 0.0
    %575 = vmatpush.msra.mxu0 %v552
    %576 = vmatpush.msra.mxu0 %v550
    %577 = vmatmul.f32.gmra.mxu0 %v556
    %v578 = vpop.f32.mrf.mxu0
    %v579 = vadd.f32 0.0, %v578
    %580 = vmatmul.f32.gmra.mxu0 %v559
    %v581 = vpop.f32.mrf.mxu0
    %v582 = vadd.f32 0.0, %v581
    %583 = vdwg.mxu0
    %584 = vrot.lane.b32.xlu0 %v140, 64
    %v585 = vpop.permute.xlu0 %584
    %586 = vrot.lane.b32.xlu0 %v142, 64
    %v587 = vpop.permute.xlu0 %586
    %v591 = vsel %vm286, %v463, 0
    %v594 = vsel %vm286, %v478, 0
    %596 = vmatpush.msra.mxu0 0.0
    %597 = vmatpush.msra.mxu0 0.0
    %598 = vmatpush.msra.mxu0 0.0
    %599 = vmatpush.msra.mxu0 0.0
    %600 = vmatpush.msra.mxu0 0.0
    %601 = vmatpush.msra.mxu0 0.0
    %602 = vmatpush.msra.mxu0 0.0
    %603 = vmatpush.msra.mxu0 0.0
    %604 = vmatpush.msra.mxu0 0.0
    %605 = vmatpush.msra.mxu0 0.0
    %606 = vmatpush.msra.mxu0 0.0
    %607 = vmatpush.msra.mxu0 0.0
    %608 = vmatpush.msra.mxu0 0.0
    %609 = vmatpush.msra.mxu0 0.0
    %610 = vmatpush.msra.mxu0 %v587
    %611 = vmatpush.msra.mxu0 %v585
    %612 = vmatmul.f32.gmra.mxu0 %v591
    %v613 = vpop.f32.mrf.mxu0
    %v614 = vadd.f32 0.0, %v613
    %615 = vmatmul.f32.gmra.mxu0 %v594
    %v616 = vpop.f32.mrf.mxu0
    %v617 = vadd.f32 0.0, %v616
    %618 = vdwg.mxu0
    %621 = vrot.lane.b32.xlu0 %v544, 8
    %v622 = vpop.permute.xlu0 %621
    %623 = vrot.lane.b32.xlu0 %v547, 8
    %v624 = vpop.permute.xlu0 %623
    %629 = vrot.lane.b32.xlu0 %v579, 16
    %v630 = vpop.permute.xlu0 %629
    %631 = vrot.lane.b32.xlu0 %v582, 16
    %v632 = vpop.permute.xlu0 %631
    %637 = vrot.lane.b32.xlu0 %v614, 24
    %v638 = vpop.permute.xlu0 %637
    %639 = vrot.lane.b32.xlu0 %v617, 24
    %v640 = vpop.permute.xlu0 %639
    %v643 = vsel %vm149, %v509, %v622
    %v644 = vsel %vm149, %v512, %v624
    %v645 = vsel %vm286, %v643, %v630
    %v646 = vsel %vm286, %v644, %v632
    %vm647 = vcmask 195584
    %v648 = vsel %vm647, %v645, %v638
    %v649 = vsel %vm647, %v646, %v640
    %v650 = vld [vmem:[%s4] sm:$0xff]
    %v651 = vld [vmem:[%s4 + $0x8] sm:$0xff]
    %v652 = vld [vmem:[%s4 + $0x10] sm:$0xff]
    %v653 = vld [vmem:[%s4 + $0x18] sm:$0xff]
    %v654 = vld [vmem:[%s5] sm:$0x1]
    %v656 = vperm.slane %v654, 0
    %v659 = vsel %vm47, %v648, 0
    %v662 = vsel %vm47, %v649, 0
    %664 = vmatpush.msra.mxu0 0.0
    %665 = vmatpush.msra.mxu0 0.0
    %666 = vmatpush.msra.mxu0 0.0
    %667 = vmatpush.msra.mxu0 0.0
    %668 = vmatpush.msra.mxu0 0.0
    %669 = vmatpush.msra.mxu0 0.0
    %670 = vmatpush.msra.mxu0 0.0
    %671 = vmatpush.msra.mxu0 0.0
    %672 = vmatpush.msra.mxu0 0.0
    %673 = vmatpush.msra.mxu0 0.0
    %674 = vmatpush.msra.mxu0 0.0
    %675 = vmatpush.msra.mxu0 0.0
    %676 = vmatpush.msra.mxu0 %v653
    %677 = vmatpush.msra.mxu0 %v652
    %678 = vmatpush.msra.mxu0 %v651
    %679 = vmatpush.msra.mxu0 %v650
    %680 = vmatmul.f32.gmra.mxu0 %v659
    %v681 = vpop.f32.mrf.mxu0
    %v682 = vadd.f32 %v656, %v681
    %683 = vmatmul.f32.gmra.mxu0 %v662
    %v684 = vpop.f32.mrf.mxu0
    %v685 = vadd.f32 %v656, %v684
    %686 = vdwg.mxu0
    %v687 = vadd.f32 %v42, %v682
    %v688 = vadd.f32 %v43, %v685
    %v689 = vld [vmem:[%s7] sm:$0x1]
    %v690 = vmul.f32 %v687, %v687
    %v691 = vmul.f32 %v688, %v688
    %v692 = vsel %vm47, %v690, 0.0
    %693 = vadd.xlane.f32.xlu0 %v692
    %v694 = vpop.xlane.xlu0 %693
    %v695 = vsel %vm47, %v691, 0.0
    %696 = vadd.xlane.f32.xlu0 %v695
    %v697 = vpop.xlane.xlu0 %696
    %v698 = vmul.f32 %v694, %v60
    %v699 = vmul.f32 %v697, %v60
    %v700 = vadd.f32 %v698, 1.1920929e-07
    %v701 = vadd.f32 %v699, 1.1920929e-07
    %v702 = vrsqrt.pop %v700
    %v703 = vmul.f32 %v702, %v700
    %v704 = vmul.f32 %v703, %v702
    %v705 = vmul.f32 0.5, %v704
    %v706 = vsub.f32 1.5, %v705
    %v707 = vmul.f32 %v702, %v706
    %vm708 = vweird.f32 %v700
    %vm709 = vweird.f32 %v702
    %vm710 = vmor %vm708, %vm709
    %v711 = vsel %vm710, %v702, %v707
    %v712 = vrsqrt.pop %v701
    %v713 = vmul.f32 %v712, %v701
    %v714 = vmul.f32 %v713, %v712
    %v715 = vmul.f32 0.5, %v714
    %v716 = vsub.f32 1.5, %v715
    %v717 = vmul.f32 %v712, %v716
    %vm718 = vweird.f32 %v701
    %vm719 = vweird.f32 %v712
    %vm720 = vmor %vm718, %vm719
    %v721 = vsel %vm720, %v712, %v717
    %v722 = vmul.f32 %v687, %v711
    %v723 = vmul.f32 %v688, %v721
    %v725 = vperm.slane %v689, 0
    %v727 = vmul.f32 %v722, %v725
    %v728 = vmul.f32 %v723, %v725
    %v729 = vld [vmem:[%s8] sm:$0xff]
    %v730 = vld [vmem:[%s8 + $0x8] sm:$0xff]
    %v731 = vld [vmem:[%s8 + $0x10] sm:$0xff]
    %v732 = vld [vmem:[%s8 + $0x18] sm:$0xff]
    %v733 = vld [vmem:[%s9] sm:$0x1]
    %v735 = vperm.slane %v733, 0
    %v738 = vsel %vm47, %v727, 0
    %v741 = vsel %vm47, %v728, 0
    %743 = vmatpush.msra.mxu0 0.0
    %744 = vmatpush.msra.mxu0 0.0
    %745 = vmatpush.msra.mxu0 0.0
    %746 = vmatpush.msra.mxu0 0.0
    %747 = vmatpush.msra.mxu0 0.0
    %748 = vmatpush.msra.mxu0 0.0
    %749 = vmatpush.msra.mxu0 0.0
    %750 = vmatpush.msra.mxu0 0.0
    %751 = vmatpush.msra.mxu0 0.0
    %752 = vmatpush.msra.mxu0 0.0
    %753 = vmatpush.msra.mxu0 0.0
    %754 = vmatpush.msra.mxu0 0.0
    %755 = vmatpush.msra.mxu0 %v732
    %756 = vmatpush.msra.mxu0 %v731
    %757 = vmatpush.msra.mxu0 %v730
    %758 = vmatpush.msra.mxu0 %v729
    %759 = vmatmul.f32.gmra.mxu0 %v738
    %v760 = vpop.f32.mrf.mxu0
    %v761 = vadd.f32 %v735, %v760
    %762 = vmatmul.f32.gmra.mxu0 %v741
    %v763 = vpop.f32.mrf.mxu0
    %v764 = vadd.f32 %v735, %v763
    %765 = vdwg.mxu0
    %v766 = vxor.u32 %v761, 2147483648
    %v767 = vxor.u32 %v764, 2147483648
    %v768 = vmul.f32 %v766, 1.442695
    %v769 = vpow.pop %v768
    %v770 = vmul.f32 %v767, 1.442695
    %v771 = vpow.pop %v770
    %v772 = vadd.f32 %v769, 1.0
    %v773 = vadd.f32 %v771, 1.0
    %v774 = vrcp.pop %v772
    %v775 = vmul.f32 %v772, %v774
    %v776 = vsub.f32 1.0, %v775
    %v777 = vmul.f32 %v774, %v776
    %v778 = vadd.f32 %v774, %v777
    %vm779 = vweird.f32 %v772
    %vm780 = vweird.f32 %v774
    %vm781 = vmor %vm779, %vm780
    %v782 = vsel %vm781, %v774, %v778
    %v783 = vand.u32 2147483647, %v772
    %vm784 = vcmp.eq.f32.partialorder %v783, 8.507059e+37
    %v785 = vand.u32 %v772, 2147483648
    %v786 = vor.u32 1.1754944e-38, %v785
    %v787 = vsel %vm784, %v786, %v782
    %v788 = vmul.f32 1.0, %v787
    %v789 = vrcp.pop %v773
    %v790 = vmul.f32 %v773, %v789
    %v791 = vsub.f32 1.0, %v790
    %v792 = vmul.f32 %v789, %v791
    %v793 = vadd.f32 %v789, %v792
    %vm794 = vweird.f32 %v773
    %vm795 = vweird.f32 %v789
    %vm796 = vmor %vm794, %vm795
    %v797 = vsel %vm796, %v789, %v793
    %v798 = vand.u32 2147483647, %v773
    %vm799 = vcmp.eq.f32.partialorder %v798, 8.507059e+37
    %v800 = vand.u32 %v773, 2147483648
    %v801 = vor.u32 1.1754944e-38, %v800
    %v802 = vsel %vm799, %v801, %v797
    %v803 = vmul.f32 1.0, %v802
    %v804 = vmul.f32 %v761, %v788
    %v805 = vmul.f32 %v764, %v803
    %808 = vrot.lane.b32.xlu0 %v804, 64
    %v809 = vpop.permute.xlu0 %808
    %810 = vrot.lane.b32.xlu0 %v805, 64
    %v811 = vpop.permute.xlu0 %810
    %v814 = vmul.f32 %v761, %v809
    %v815 = vmul.f32 %v764, %v811
    %v816 = vld [vmem:[%s10] sm:$0xff]
    %v817 = vld [vmem:[%s10 + $0x8] sm:$0xff]
    %v818 = vld [vmem:[%s10 + $0x10] sm:$0xff]
    %v819 = vld [vmem:[%s10 + $0x18] sm:$0xff]
    %v820 = vld [vmem:[%s10 + $0x20] sm:$0xff]
    %v821 = vld [vmem:[%s10 + $0x28] sm:$0xff]
    %v822 = vld [vmem:[%s10 + $0x30] sm:$0xff]
    %v823 = vld [vmem:[%s10 + $0x38] sm:$0xff]
    %v824 = vld [vmem:[%s11] sm:$0x1]
    %v826 = vperm.slane %v824, 0
    %vm828 = vcmask 523264
    %v830 = vsel %vm828, %v814, 0
    %v833 = vsel %vm828, %v815, 0
    %835 = vmatpush.msra.mxu0 0.0
    %836 = vmatpush.msra.mxu0 0.0
    %837 = vmatpush.msra.mxu0 0.0
    %838 = vmatpush.msra.mxu0 0.0
    %839 = vmatpush.msra.mxu0 0.0
    %840 = vmatpush.msra.mxu0 0.0
    %841 = vmatpush.msra.mxu0 0.0
    %842 = vmatpush.msra.mxu0 0.0
    %843 = vmatpush.msra.mxu0 %v823
    %844 = vmatpush.msra.mxu0 %v822
    %845 = vmatpush.msra.mxu0 %v821
    %846 = vmatpush.msra.mxu0 %v820
    %847 = vmatpush.msra.mxu0 %v819
    %848 = vmatpush.msra.mxu0 %v818
    %849 = vmatpush.msra.mxu0 %v817
    %850 = vmatpush.msra.mxu0 %v816
    %851 = vmatmul.f32.gmra.mxu0 %v830
    %v852 = vpop.f32.mrf.mxu0
    %v853 = vadd.f32 %v826, %v852
    %854 = vmatmul.f32.gmra.mxu0 %v833
    %v855 = vpop.f32.mrf.mxu0
    %v856 = vadd.f32 %v826, %v855
    %857 = vdwg.mxu0
    %s858 = scalar_lea.vmem %s7, 1
    %v859 = vld [vmem:[%s858] sm:$0x1]
    %v860 = vmul.f32 %v853, %v853
    %v861 = vmul.f32 %v856, %v856
    %v862 = vsel %vm47, %v860, 0.0
    %863 = vadd.xlane.f32.xlu0 %v862
    %v864 = vpop.xlane.xlu0 %863
    %v865 = vsel %vm47, %v861, 0.0
    %866 = vadd.xlane.f32.xlu0 %v865
    %v867 = vpop.xlane.xlu0 %866
    %v868 = vmul.f32 %v864, %v60
    %v869 = vmul.f32 %v867, %v60
    %v870 = vadd.f32 %v868, 1.1920929e-07
    %v871 = vadd.f32 %v869, 1.1920929e-07
    %v872 = vrsqrt.pop %v870
    %v873 = vmul.f32 %v872, %v870
    %v874 = vmul.f32 %v873, %v872
    %v875 = vmul.f32 0.5, %v874
    %v876 = vsub.f32 1.5, %v875
    %v877 = vmul.f32 %v872, %v876
    %vm878 = vweird.f32 %v870
    %vm879 = vweird.f32 %v872
    %vm880 = vmor %vm878, %vm879
    %v881 = vsel %vm880, %v872, %v877
    %v882 = vrsqrt.pop %v871
    %v883 = vmul.f32 %v882, %v871
    %v884 = vmul.f32 %v883, %v882
    %v885 = vmul.f32 0.5, %v884
    %v886 = vsub.f32 1.5, %v885
    %v887 = vmul.f32 %v882, %v886
    %vm888 = vweird.f32 %v871
    %vm889 = vweird.f32 %v882
    %vm890 = vmor %vm888, %vm889
    %v891 = vsel %vm890, %v882, %v887
    %v892 = vmul.f32 %v853, %v881
    %v893 = vmul.f32 %v856, %v891
    %v895 = vperm.slane %v859, 0
    %v897 = vmul.f32 %v892, %v895
    %v898 = vmul.f32 %v893, %v895
    %s899 = scalar_lea.vmem %s8, 32
    %v900 = vld [vmem:[%s899] sm:$0xff]
    %v901 = vld [vmem:[%s899 + $0x8] sm:$0xff]
    %v902 = vld [vmem:[%s899 + $0x10] sm:$0xff]
    %v903 = vld [vmem:[%s899 + $0x18] sm:$0xff]
    %s904 = scalar_lea.vmem %s9, 1
    %v905 = vld [vmem:[%s904] sm:$0x1]
    %v907 = vperm.slane %v905, 0
    %v910 = vsel %vm47, %v897, 0
    %v913 = vsel %vm47, %v898, 0
    %915 = vmatpush.msra.mxu0 0.0
    %916 = vmatpush.msra.mxu0 0.0
    %917 = vmatpush.msra.mxu0 0.0
    %918 = vmatpush.msra.mxu0 0.0
    %919 = vmatpush.msra.mxu0 0.0
    %920 = vmatpush.msra.mxu0 0.0
    %921 = vmatpush.msra.mxu0 0.0
    %922 = vmatpush.msra.mxu0 0.0
    %923 = vmatpush.msra.mxu0 0.0
    %924 = vmatpush.msra.mxu0 0.0
    %925 = vmatpush.msra.mxu0 0.0
    %926 = vmatpush.msra.mxu0 0.0
    %927 = vmatpush.msra.mxu0 %v903
    %928 = vmatpush.msra.mxu0 %v902
    %929 = vmatpush.msra.mxu0 %v901
    %930 = vmatpush.msra.mxu0 %v900
    %931 = vmatmul.f32.gmra.mxu0 %v910
    %v932 = vpop.f32.mrf.mxu0
    %v933 = vadd.f32 %v907, %v932
    %934 = vmatmul.f32.gmra.mxu0 %v913
    %v935 = vpop.f32.mrf.mxu0
    %v936 = vadd.f32 %v907, %v935
    %937 = vdwg.mxu0
    %v938 = vxor.u32 %v933, 2147483648
    %v939 = vxor.u32 %v936, 2147483648
    %v940 = vmul.f32 %v938, 1.442695
    %v941 = vpow.pop %v940
    %v942 = vmul.f32 %v939, 1.442695
    %v943 = vpow.pop %v942
    %v944 = vadd.f32 %v941, 1.0
    %v945 = vadd.f32 %v943, 1.0
    %v946 = vrcp.pop %v944
    %v947 = vmul.f32 %v944, %v946
    %v948 = vsub.f32 1.0, %v947
    %v949 = vmul.f32 %v946, %v948
    %v950 = vadd.f32 %v946, %v949
    %vm951 = vweird.f32 %v944
    %vm952 = vweird.f32 %v946
    %vm953 = vmor %vm951, %vm952
    %v954 = vsel %vm953, %v946, %v950
    %v955 = vand.u32 2147483647, %v944
    %vm956 = vcmp.eq.f32.partialorder %v955, 8.507059e+37
    %v957 = vand.u32 %v944, 2147483648
    %v958 = vor.u32 1.1754944e-38, %v957
    %v959 = vsel %vm956, %v958, %v954
    %v960 = vmul.f32 1.0, %v959
    %v961 = vrcp.pop %v945
    %v962 = vmul.f32 %v945, %v961
    %v963 = vsub.f32 1.0, %v962
    %v964 = vmul.f32 %v961, %v963
    %v965 = vadd.f32 %v961, %v964
    %vm966 = vweird.f32 %v945
    %vm967 = vweird.f32 %v961
    %vm968 = vmor %vm966, %vm967
    %v969 = vsel %vm968, %v961, %v965
    %v970 = vand.u32 2147483647, %v945
    %vm971 = vcmp.eq.f32.partialorder %v970, 8.507059e+37
    %v972 = vand.u32 %v945, 2147483648
    %v973 = vor.u32 1.1754944e-38, %v972
    %v974 = vsel %vm971, %v973, %v969
    %v975 = vmul.f32 1.0, %v974
    %v976 = vmul.f32 %v933, %v960
    %v977 = vmul.f32 %v936, %v975
    %980 = vrot.lane.b32.xlu0 %v976, 64
    %v981 = vpop.permute.xlu0 %980
    %982 = vrot.lane.b32.xlu0 %v977, 64
    %v983 = vpop.permute.xlu0 %982
    %v986 = vmul.f32 %v933, %v981
    %v987 = vmul.f32 %v936, %v983
    %s988 = scalar_lea.vmem %s10, 64
    %v989 = vld [vmem:[%s988] sm:$0xff]
    %v990 = vld [vmem:[%s988 + $0x8] sm:$0xff]
    %v991 = vld [vmem:[%s988 + $0x10] sm:$0xff]
    %v992 = vld [vmem:[%s988 + $0x18] sm:$0xff]
    %v993 = vld [vmem:[%s988 + $0x20] sm:$0xff]
    %v994 = vld [vmem:[%s988 + $0x28] sm:$0xff]
    %v995 = vld [vmem:[%s988 + $0x30] sm:$0xff]
    %v996 = vld [vmem:[%s988 + $0x38] sm:$0xff]
    %s997 = scalar_lea.vmem %s11, 1
    %v998 = vld [vmem:[%s997] sm:$0x1]
    %v1000 = vperm.slane %v998, 0
    %v1003 = vsel %vm828, %v986, 0
    %v1006 = vsel %vm828, %v987, 0
    %1008 = vmatpush.msra.mxu0 0.0
    %1009 = vmatpush.msra.mxu0 0.0
    %1010 = vmatpush.msra.mxu0 0.0
    %1011 = vmatpush.msra.mxu0 0.0
    %1012 = vmatpush.msra.mxu0 0.0
    %1013 = vmatpush.msra.mxu0 0.0
    %1014 = vmatpush.msra.mxu0 0.0
    %1015 = vmatpush.msra.mxu0 0.0
    %1016 = vmatpush.msra.mxu0 %v996
    %1017 = vmatpush.msra.mxu0 %v995
    %1018 = vmatpush.msra.mxu0 %v994
    %1019 = vmatpush.msra.mxu0 %v993
    %1020 = vmatpush.msra.mxu0 %v992
    %1021 = vmatpush.msra.mxu0 %v991
    %1022 = vmatpush.msra.mxu0 %v990
    %1023 = vmatpush.msra.mxu0 %v989
    %1024 = vmatmul.f32.gmra.mxu0 %v1003
    %v1025 = vpop.f32.mrf.mxu0
    %v1026 = vadd.f32 %v1000, %v1025
    %1027 = vmatmul.f32.gmra.mxu0 %v1006
    %v1028 = vpop.f32.mrf.mxu0
    %v1029 = vadd.f32 %v1000, %v1028
    %1030 = vdwg.mxu0
    %s1031 = scalar_lea.vmem %s7, 2
    %v1032 = vld [vmem:[%s1031] sm:$0x1]
    %v1033 = vmul.f32 %v1026, %v1026
    %v1034 = vmul.f32 %v1029, %v1029
    %v1035 = vsel %vm47, %v1033, 0.0
    %1036 = vadd.xlane.f32.xlu0 %v1035
    %v1037 = vpop.xlane.xlu0 %1036
    %v1038 = vsel %vm47, %v1034, 0.0
    %1039 = vadd.xlane.f32.xlu0 %v1038
    %v1040 = vpop.xlane.xlu0 %1039
    %v1041 = vmul.f32 %v1037, %v60
    %v1042 = vmul.f32 %v1040, %v60
    %v1043 = vadd.f32 %v1041, 1.1920929e-07
    %v1044 = vadd.f32 %v1042, 1.1920929e-07
    %v1045 = vrsqrt.pop %v1043
    %v1046 = vmul.f32 %v1045, %v1043
    %v1047 = vmul.f32 %v1046, %v1045
    %v1048 = vmul.f32 0.5, %v1047
    %v1049 = vsub.f32 1.5, %v1048
    %v1050 = vmul.f32 %v1045, %v1049
    %vm1051 = vweird.f32 %v1043
    %vm1052 = vweird.f32 %v1045
    %vm1053 = vmor %vm1051, %vm1052
    %v1054 = vsel %vm1053, %v1045, %v1050
    %v1055 = vrsqrt.pop %v1044
    %v1056 = vmul.f32 %v1055, %v1044
    %v1057 = vmul.f32 %v1056, %v1055
    %v1058 = vmul.f32 0.5, %v1057
    %v1059 = vsub.f32 1.5, %v1058
    %v1060 = vmul.f32 %v1055, %v1059
    %vm1061 = vweird.f32 %v1044
    %vm1062 = vweird.f32 %v1055
    %vm1063 = vmor %vm1061, %vm1062
    %v1064 = vsel %vm1063, %v1055, %v1060
    %v1065 = vmul.f32 %v1026, %v1054
    %v1066 = vmul.f32 %v1029, %v1064
    %v1068 = vperm.slane %v1032, 0
    %v1070 = vmul.f32 %v1065, %v1068
    %v1071 = vmul.f32 %v1066, %v1068
    %s1072 = scalar_lea.vmem %s8, 64
    %v1073 = vld [vmem:[%s1072] sm:$0xff]
    %v1074 = vld [vmem:[%s1072 + $0x8] sm:$0xff]
    %v1075 = vld [vmem:[%s1072 + $0x10] sm:$0xff]
    %v1076 = vld [vmem:[%s1072 + $0x18] sm:$0xff]
    %s1077 = scalar_lea.vmem %s9, 2
    %v1078 = vld [vmem:[%s1077] sm:$0x1]
    %v1080 = vperm.slane %v1078, 0
    %v1083 = vsel %vm47, %v1070, 0
    %v1086 = vsel %vm47, %v1071, 0
    %1088 = vmatpush.msra.mxu0 0.0
    %1089 = vmatpush.msra.mxu0 0.0
    %1090 = vmatpush.msra.mxu0 0.0
    %1091 = vmatpush.msra.mxu0 0.0
    %1092 = vmatpush.msra.mxu0 0.0
    %1093 = vmatpush.msra.mxu0 0.0
    %1094 = vmatpush.msra.mxu0 0.0
    %1095 = vmatpush.msra.mxu0 0.0
    %1096 = vmatpush.msra.mxu0 0.0
    %1097 = vmatpush.msra.mxu0 0.0
    %1098 = vmatpush.msra.mxu0 0.0
    %1099 = vmatpush.msra.mxu0 0.0
    %1100 = vmatpush.msra.mxu0 %v1076
    %1101 = vmatpush.msra.mxu0 %v1075
    %1102 = vmatpush.msra.mxu0 %v1074
    %1103 = vmatpush.msra.mxu0 %v1073
    %1104 = vmatmul.f32.gmra.mxu0 %v1083
    %v1105 = vpop.f32.mrf.mxu0
    %v1106 = vadd.f32 %v1080, %v1105
    %1107 = vmatmul.f32.gmra.mxu0 %v1086
    %v1108 = vpop.f32.mrf.mxu0
    %v1109 = vadd.f32 %v1080, %v1108
    %1110 = vdwg.mxu0
    %v1111 = vxor.u32 %v1106, 2147483648
    %v1112 = vxor.u32 %v1109, 2147483648
    %v1113 = vmul.f32 %v1111, 1.442695
    %v1114 = vpow.pop %v1113
    %v1115 = vmul.f32 %v1112, 1.442695
    %v1116 = vpow.pop %v1115
    %v1117 = vadd.f32 %v1114, 1.0
    %v1118 = vadd.f32 %v1116, 1.0
    %v1119 = vrcp.pop %v1117
    %v1120 = vmul.f32 %v1117, %v1119
    %v1121 = vsub.f32 1.0, %v1120
    %v1122 = vmul.f32 %v1119, %v1121
    %v1123 = vadd.f32 %v1119, %v1122
    %vm1124 = vweird.f32 %v1117
    %vm1125 = vweird.f32 %v1119
    %vm1126 = vmor %vm1124, %vm1125
    %v1127 = vsel %vm1126, %v1119, %v1123
    %v1128 = vand.u32 2147483647, %v1117
    %vm1129 = vcmp.eq.f32.partialorder %v1128, 8.507059e+37
    %v1130 = vand.u32 %v1117, 2147483648
    %v1131 = vor.u32 1.1754944e-38, %v1130
    %v1132 = vsel %vm1129, %v1131, %v1127
    %v1133 = vmul.f32 1.0, %v1132
    %v1134 = vrcp.pop %v1118
    %v1135 = vmul.f32 %v1118, %v1134
    %v1136 = vsub.f32 1.0, %v1135
    %v1137 = vmul.f32 %v1134, %v1136
    %v1138 = vadd.f32 %v1134, %v1137
    %vm1139 = vweird.f32 %v1118
    %vm1140 = vweird.f32 %v1134
    %vm1141 = vmor %vm1139, %vm1140
    %v1142 = vsel %vm1141, %v1134, %v1138
    %v1143 = vand.u32 2147483647, %v1118
    %vm1144 = vcmp.eq.f32.partialorder %v1143, 8.507059e+37
    %v1145 = vand.u32 %v1118, 2147483648
    %v1146 = vor.u32 1.1754944e-38, %v1145
    %v1147 = vsel %vm1144, %v1146, %v1142
    %v1148 = vmul.f32 1.0, %v1147
    %v1149 = vmul.f32 %v1106, %v1133
    %v1150 = vmul.f32 %v1109, %v1148
    %1153 = vrot.lane.b32.xlu0 %v1149, 64
    %v1154 = vpop.permute.xlu0 %1153
    %1155 = vrot.lane.b32.xlu0 %v1150, 64
    %v1156 = vpop.permute.xlu0 %1155
    %v1159 = vmul.f32 %v1106, %v1154
    %v1160 = vmul.f32 %v1109, %v1156
    %s1161 = scalar_lea.vmem %s10, 128
    %v1162 = vld [vmem:[%s1161] sm:$0xff]
    %v1163 = vld [vmem:[%s1161 + $0x8] sm:$0xff]
    %v1164 = vld [vmem:[%s1161 + $0x10] sm:$0xff]
    %v1165 = vld [vmem:[%s1161 + $0x18] sm:$0xff]
    %v1166 = vld [vmem:[%s1161 + $0x20] sm:$0xff]
    %v1167 = vld [vmem:[%s1161 + $0x28] sm:$0xff]
    %v1168 = vld [vmem:[%s1161 + $0x30] sm:$0xff]
    %v1169 = vld [vmem:[%s1161 + $0x38] sm:$0xff]
    %s1170 = scalar_lea.vmem %s11, 2
    %v1171 = vld [vmem:[%s1170] sm:$0x1]
    %v1173 = vperm.slane %v1171, 0
    %v1176 = vsel %vm828, %v1159, 0
    %v1179 = vsel %vm828, %v1160, 0
    %1181 = vmatpush.msra.mxu0 0.0
    %1182 = vmatpush.msra.mxu0 0.0
    %1183 = vmatpush.msra.mxu0 0.0
    %1184 = vmatpush.msra.mxu0 0.0
    %1185 = vmatpush.msra.mxu0 0.0
    %1186 = vmatpush.msra.mxu0 0.0
    %1187 = vmatpush.msra.mxu0 0.0
    %1188 = vmatpush.msra.mxu0 0.0
    %1189 = vmatpush.msra.mxu0 %v1169
    %1190 = vmatpush.msra.mxu0 %v1168
    %1191 = vmatpush.msra.mxu0 %v1167
    %1192 = vmatpush.msra.mxu0 %v1166
    %1193 = vmatpush.msra.mxu0 %v1165
    %1194 = vmatpush.msra.mxu0 %v1164
    %1195 = vmatpush.msra.mxu0 %v1163
    %1196 = vmatpush.msra.mxu0 %v1162
    %1197 = vmatmul.f32.gmra.mxu0 %v1176
    %v1198 = vpop.f32.mrf.mxu0
    %v1199 = vadd.f32 %v1173, %v1198
    %1200 = vmatmul.f32.gmra.mxu0 %v1179
    %v1201 = vpop.f32.mrf.mxu0
    %v1202 = vadd.f32 %v1173, %v1201
    %1203 = vdwg.mxu0
    %v1204 = vadd.f32 %v687, %v1199
    %v1205 = vadd.f32 %v688, %v1202
    %1206 = vst.msk [vmem:[#allocation2] sm:$0xff] %vm47, %v1204
    %1207 = vst.msk [vmem:[#allocation2 + $0x8] sm:$0xff] %vm47, %v1205
    // Predicated region
    $region50: #{tpu_custom_call.1} parent=1 // pred_check
      _
    $region51: #{tpu_custom_call.1} parent=1 // pred_check_branch
      %1209 = sbr.rel (0) target = $region53
    $region52: #{tpu_custom_call.1} parent=1 // pred_region
      %1211 = vsyncadd [#allocation3], 0
      %s1212 = sshll.u32 [#allocation2], 4
      %s1213 = int_to_ptr.vmem [resolvable:$true] %s1212
      %s1214 = sshll.u32 %s12, 4
      %s1215 = int_to_ptr.hbm [resolvable:$true] %s1214
      %1220 = dma.vmem_to_hbm [thread:$0]  %s1213, 256, %s1215, [#allocation3], 128, 128, 8
    $region53: #{tpu_custom_call.1} parent=1 // pred_fallthru
      _
    // Predicated region
    $region54: #{tpu_custom_call.1} parent=1 // pred_check
      _
    $region55: #{tpu_custom_call.1} parent=1 // pred_check_branch
      %1222 = sbr.rel (0) target = $region57
    $region56: #{tpu_custom_call.1} parent=1 // pred_region
      %1224 = dma.done [#allocation3], 256
    $region57: #{tpu_custom_call.1} parent=1 // pred_fallthru
      _
    %1225 = vsyncpa [#allocation3], 1

</llo_original>
